<compile_context>
chip_gen: v7x
topology: tpu7x:2x2x1
jax: 0.10.0
libtpu: 0.0.40
codegen_flags: <defaults>
</compile_context>

<pallas_src>
import jax
import jax.numpy as jnp
from jax import lax
from jax.experimental import pallas as pl
from jax.experimental.pallas import tpu as pltpu

KSIZE = 4
STRIDE = 2
LANE = 128


# ----------------------------- Pallas kernel -------------------------------
def _final_block_kernel(x_ref, w_ref, b_ref, o_ref):
    # x_ref : (C, 2, 2, H2, W2, B)  VMEM  -- parity planes, batch in lanes
    # w_ref : (C*16,)               SMEM  -- conv weight, flattened (c, kh, kw)
    # b_ref : (1,)                  SMEM  -- conv bias
    # o_ref : (OH, OW, B)           VMEM  -- f32 output block (lane-dense)
    C = x_ref.shape[0]
    H2, W2, B = x_ref.shape[3], x_ref.shape[4], x_ref.shape[5]
    OH, OW = H2 - 1, W2 - 1

    full = (H2, W2, B)
    # Four independent accumulators (one per (dh, dw)) -> no serial VALU chain
    # and no per-tap slicing; acc[0] starts at the bias so it is added once.
    acc = [jnp.full(full, b_ref[0], dtype=jnp.float32),
           jnp.zeros(full, jnp.float32),
           jnp.zeros(full, jnp.float32),
           jnp.zeros(full, jnp.float32)]

    if C <= 8:
        # Small channel counts: fully static unroll (best LLO scheduling).
        for c in range(C):
            for p in range(2):            # kh parity
                for q in range(2):        # kw parity
                    plane = x_ref[c, p, q].astype(jnp.float32)   # (H2, W2, B)
                    for dh in range(2):
                        for dw in range(2):
                            kh = 2 * dh + p
                            kw = 2 * dw + q
                            w = w_ref[c * (KSIZE * KSIZE) + kh * KSIZE + kw]
                            acc[2 * dh + dw] = acc[2 * dh + dw] + plane * w
    else:
        # Large channel counts: bounded-register fori_loop over channels.
        # TODO(synk): for very large in_channels a channel grid axis with a
        # VMEM accumulator would also bound the per-step input block size.
        def body(c, accs):
            a = list(accs)
            ch = x_ref[c].astype(jnp.float32)                    # (2, 2, H2, W2, B)
            base = c * (KSIZE * KSIZE)
            for p in range(2):
                for q in range(2):
                    plane = ch[p, q]
                    for dh in range(2):
                        for dw in range(2):
                            kh = 2 * dh + p
                            kw = 2 * dw + q
                            w = w_ref[base + kh * KSIZE + kw]
                            a[2 * dh + dw] = a[2 * dh + dw] + plane * w
            return tuple(a)

        acc = list(lax.fori_loop(0, C, body, tuple(acc), unroll=4))

    # Combine the four shifted accumulators (only 4 static slices total).
    s = (acc[0][0:OH, 0:OW, :]
         + acc[1][0:OH, 1:1 + OW, :]
         + acc[2][1:1 + OH, 0:OW, :]
         + acc[3][1:1 + OH, 1:1 + OW, :])
    o_ref[...] = jax.nn.sigmoid(s).astype(o_ref.dtype)


# --------------------------- block-size selection ---------------------------
def _choose_batch_block(n, per_item_bytes):
    """Batch block size: multiple of 128 (lane-dense, unmasked stores),
    capped by a conservative VMEM budget (v7x-safe), and sized so that
    realistic batches produce >=2 grid blocks (v7x megacore)."""
    budget = 24 * 1024 * 1024                      # under the 32 MiB scoped limit
    vmem_cap = max(LANE, (budget // max(per_item_bytes, 1)) // LANE * LANE)
    if n <= LANE:
        blk = LANE
    else:
        blk = LANE * pl.cdiv(pl.cdiv(n, 2), LANE)  # aim for >= 2 blocks
        blk = min(blk, 4 * LANE)                   # keep per-step DMA moderate
    return min(blk, vmem_cap)


# ------------------------------- wrapper ------------------------------------
def d_final_block(x, weight, bias, *, stream_bf16=False):
    """Forward pass of D_FinalBlock.

    x      : (N, C, H, W)   float32
    weight : (1, C, 4, 4)   float32   (PyTorch Conv2d weight layout)
    bias   : (1,)           float32
    returns: (N, 1, OH, OW) float32,  OH = (H-4)//2 + 1, OW = (W-4)//2 + 1
    """
    N, C, H, W = x.shape
    OH = (H - KSIZE) // STRIDE + 1
    OW = (W - KSIZE) // STRIDE + 1
    H2, W2 = OH + 1, OW + 1

    in_dtype = jnp.bfloat16 if stream_bf16 else jnp.float32
    itemsize = 2 if stream_bf16 else 4

    # Per-batch-item VMEM footprint: double-buffered in/out blocks + 4 f32 accs.
    per_item_bytes = (2 * C * 4 * H2 * W2 * itemsize
                      + 2 * OH * OW * 4
                      + 4 * H2 * W2 * 4)
    Bblk = _choose_batch_block(N, per_item_bytes)
    Npad = Bblk * pl.cdiv(N, Bblk)

    x = x.astype(in_dtype)
    if Npad != N:
        x = jnp.pad(x, ((0, Npad - N), (0, 0), (0, 0), (0, 0)))

    # Single layout pass (pad + reshape + transpose fuse into one XLA copy):
    #   x_planes[c, p, q, a, b, n] = x[n, c, 2a+p, 2b+q]
    # Batch goes to the lane (last) axis; parities go in front so each stride-2
    # tap plane is a contiguous (H2, W2, B) slab inside the kernel.
    x_planes = (x[:, :, :2 * H2, :2 * W2]
                .reshape(Npad, C, H2, 2, W2, 2)
                .transpose(1, 3, 5, 2, 4, 0))            # (C, 2, 2, H2, W2, Npad)

    w_flat = weight.reshape(C * KSIZE * KSIZE).astype(jnp.float32)  # (c, kh, kw)
    b = bias.reshape(1).astype(jnp.float32)

    cost = pl.CostEstimate(
        flops=2 * C * KSIZE * KSIZE * H2 * W2 * Npad,
        transcendentals=OH * OW * Npad,
        bytes_accessed=(x_planes.size * itemsize
                        + OH * OW * Npad * 4
                        + w_flat.size * 4 + 4),
    )

    out = pl.pallas_call(
        _final_block_kernel,
        out_shape=jax.ShapeDtypeStruct((OH, OW, Npad), jnp.float32),
        grid=(Npad // Bblk,),
        in_specs=[
            pl.BlockSpec((C, 2, 2, H2, W2, Bblk), lambda i: (0, 0, 0, 0, 0, i)),
            pl.BlockSpec(memory_space=pltpu.MemorySpace.SMEM),
            pl.BlockSpec(memory_space=pltpu.MemorySpace.SMEM),
        ],
        out_specs=pl.BlockSpec((OH, OW, Bblk), lambda i: (0, 0, i)),
        compiler_params=pltpu.CompilerParams(
            dimension_semantics=("parallel",),
            vmem_limit_bytes=32 * 1024 * 1024,
        ),
        cost_estimate=cost,
    )(x_planes, w_flat, b)

    # (OH, OW, Npad) -> NCHW.  The output is tiny (49 elems/item) compared to
    # the input, so this un-transpose is negligible HBM traffic.
    return out[:, :, :N].transpose(2, 0, 1).reshape(N, 1, OH, OW)


# --------------------------- pure-JAX reference -----------------------------
def _reference(x, weight, bias):
    y = lax.conv_general_dilated(
        x, weight,
        window_strides=(STRIDE, STRIDE),
        padding="VALID",
        dimension_numbers=("NCHW", "OIHW", "NCHW"),
    )
    return jax.nn.sigmoid(y + bias.reshape(1, 1, 1, 1))


# ---------------------------------- main ------------------------------------
if __name__ == "__main__":
    key = jax.random.PRNGKey(0)
    k_x, k_w, k_b = jax.random.split(key, 3)

    N, C, H, W = 2, 4, 16, 16                     # input: (2, 4, 16, 16)
    x = jax.random.normal(k_x, (N, C, H, W), dtype=jnp.float32)

    # Deterministic Conv2d(in=C, out=1, k=4) init (uniform, like PyTorch's scheme)
    fan_in = C * KSIZE * KSIZE
    bound = 1.0 / (fan_in ** 0.5)
    weight = jax.random.uniform(k_w, (1, C, KSIZE, KSIZE),
                                minval=-bound, maxval=bound, dtype=jnp.float32)
    bias = jax.random.uniform(k_b, (1,), minval=-bound, maxval=bound, dtype=jnp.float32)

    ref = _reference(x, weight, bias)

    # f32 path (exact semantics of the PyTorch module).
    out = jax.block_until_ready(d_final_block(x, weight, bias))
    assert out.shape == (N, 1, (H - KSIZE) // STRIDE + 1, (W - KSIZE) // STRIDE + 1)
    assert jnp.allclose(out, ref, atol=1e-5, rtol=1e-5)

    # bf16-streaming path (v6e/v7x bandwidth optimization; f32 accumulation).
    out_bf16 = jax.block_until_ready(d_final_block(x, weight, bias, stream_bf16=True))
    assert jnp.allclose(out_bf16, ref, atol=2e-2, rtol=2e-2)

    print("KERNEL_OK")
</pallas_src>

<mosaic_0001>
module attributes {stable_mosaic.version = 11 : i64} {
  func.func @_final_block_kernel(%arg0: i32, %arg1: memref<4x2x2x8x8x128xf32, #tpu.memory_space<vmem>>, %arg2: memref<64xf32, #tpu.memory_space<smem>>, %arg3: memref<1xf32, #tpu.memory_space<smem>>, %arg4: memref<7x7x128xf32, #tpu.memory_space<vmem>>) attributes {dimension_semantics = [#tpu.dimension_semantics<parallel>], iteration_bounds = array<i64: 1>, scalar_prefetch = 0 : i64, scratch_operands = 0 : i64, tpu.core_type = #tpu.core_type<tc>, window_params = [{transform_indices = @transform_0, window_bounds = array<i64: 4, 2, 2, 8, 8, 128>}, {transform_indices = @transform_1, window_bounds = array<i64: 64>}, {transform_indices = @transform_2, window_bounds = array<i64: 1>}, {transform_indices = @transform_3, window_bounds = array<i64: 7, 7, 128>}]} {
    %c0 = arith.constant 0 : index
    %0 = memref.load %arg3[%c0] : memref<1xf32, #tpu.memory_space<smem>>
    %1 = vector.broadcast %0 : f32 to vector<8x8x128xf32>
    %cst = arith.constant 0.000000e+00 : f32
    %2 = vector.broadcast %cst : f32 to vector<8x8x128xf32>
    %cst_0 = arith.constant 0.000000e+00 : f32
    %3 = vector.broadcast %cst_0 : f32 to vector<8x8x128xf32>
    %cst_1 = arith.constant 0.000000e+00 : f32
    %4 = vector.broadcast %cst_1 : f32 to vector<8x8x128xf32>
    %c0_2 = arith.constant 0 : index
    %c0_3 = arith.constant 0 : index
    %c0_4 = arith.constant 0 : index
    %c0_5 = arith.constant 0 : index
    %c0_6 = arith.constant 0 : index
    %c0_7 = arith.constant 0 : index
    %5 = vector.load %arg1[%c0_2, %c0_3, %c0_4, %c0_5, %c0_6, %c0_7] : memref<4x2x2x8x8x128xf32, #tpu.memory_space<vmem>>, vector<1x1x1x8x8x128xf32>
    %6 = vector.shape_cast %5 : vector<1x1x1x8x8x128xf32> to vector<8x8x128xf32>
    %c0_8 = arith.constant 0 : index
    %7 = memref.load %arg2[%c0_8] : memref<64xf32, #tpu.memory_space<smem>>
    %8 = vector.broadcast %7 : f32 to vector<8x8x128xf32>
    %9 = arith.mulf %6, %8 : vector<8x8x128xf32>
    %10 = arith.addf %1, %9 : vector<8x8x128xf32>
    %c2 = arith.constant 2 : index
    %11 = memref.load %arg2[%c2] : memref<64xf32, #tpu.memory_space<smem>>
    %12 = vector.broadcast %11 : f32 to vector<8x8x128xf32>
    %13 = arith.mulf %6, %12 : vector<8x8x128xf32>
    %14 = arith.addf %2, %13 : vector<8x8x128xf32>
    %c8 = arith.constant 8 : index
    %15 = memref.load %arg2[%c8] : memref<64xf32, #tpu.memory_space<smem>>
    %16 = vector.broadcast %15 : f32 to vector<8x8x128xf32>
    %17 = arith.mulf %6, %16 : vector<8x8x128xf32>
    %18 = arith.addf %3, %17 : vector<8x8x128xf32>
    %c10 = arith.constant 10 : index
    %19 = memref.load %arg2[%c10] : memref<64xf32, #tpu.memory_space<smem>>
    %20 = vector.broadcast %19 : f32 to vector<8x8x128xf32>
    %21 = arith.mulf %6, %20 : vector<8x8x128xf32>
    %22 = arith.addf %4, %21 : vector<8x8x128xf32>
    %c0_9 = arith.constant 0 : index
    %c0_10 = arith.constant 0 : index
    %c1 = arith.constant 1 : index
    %c0_11 = arith.constant 0 : index
    %c0_12 = arith.constant 0 : index
    %c0_13 = arith.constant 0 : index
    %23 = vector.load %arg1[%c0_9, %c0_10, %c1, %c0_11, %c0_12, %c0_13] : memref<4x2x2x8x8x128xf32, #tpu.memory_space<vmem>>, vector<1x1x1x8x8x128xf32>
    %24 = vector.shape_cast %23 : vector<1x1x1x8x8x128xf32> to vector<8x8x128xf32>
    %c1_14 = arith.constant 1 : index
    %25 = memref.load %arg2[%c1_14] : memref<64xf32, #tpu.memory_space<smem>>
    %26 = vector.broadcast %25 : f32 to vector<8x8x128xf32>
    %27 = arith.mulf %24, %26 : vector<8x8x128xf32>
    %28 = arith.addf %10, %27 : vector<8x8x128xf32>
    %c3 = arith.constant 3 : index
    %29 = memref.load %arg2[%c3] : memref<64xf32, #tpu.memory_space<smem>>
    %30 = vector.broadcast %29 : f32 to vector<8x8x128xf32>
    %31 = arith.mulf %24, %30 : vector<8x8x128xf32>
    %32 = arith.addf %14, %31 : vector<8x8x128xf32>
    %c9 = arith.constant 9 : index
    %33 = memref.load %arg2[%c9] : memref<64xf32, #tpu.memory_space<smem>>
    %34 = vector.broadcast %33 : f32 to vector<8x8x128xf32>
    %35 = arith.mulf %24, %34 : vector<8x8x128xf32>
    %36 = arith.addf %18, %35 : vector<8x8x128xf32>
    %c11 = arith.constant 11 : index
    %37 = memref.load %arg2[%c11] : memref<64xf32, #tpu.memory_space<smem>>
    %38 = vector.broadcast %37 : f32 to vector<8x8x128xf32>
    %39 = arith.mulf %24, %38 : vector<8x8x128xf32>
    %40 = arith.addf %22, %39 : vector<8x8x128xf32>
    %c0_15 = arith.constant 0 : index
    %c1_16 = arith.constant 1 : index
    %c0_17 = arith.constant 0 : index
    %c0_18 = arith.constant 0 : index
    %c0_19 = arith.constant 0 : index
    %c0_20 = arith.constant 0 : index
    %41 = vector.load %arg1[%c0_15, %c1_16, %c0_17, %c0_18, %c0_19, %c0_20] : memref<4x2x2x8x8x128xf32, #tpu.memory_space<vmem>>, vector<1x1x1x8x8x128xf32>
    %42 = vector.shape_cast %41 : vector<1x1x1x8x8x128xf32> to vector<8x8x128xf32>
    %c4 = arith.constant 4 : index
    %43 = memref.load %arg2[%c4] : memref<64xf32, #tpu.memory_space<smem>>
    %44 = vector.broadcast %43 : f32 to vector<8x8x128xf32>
    %45 = arith.mulf %42, %44 : vector<8x8x128xf32>
    %46 = arith.addf %28, %45 : vector<8x8x128xf32>
    %c6 = arith.constant 6 : index
    %47 = memref.load %arg2[%c6] : memref<64xf32, #tpu.memory_space<smem>>
    %48 = vector.broadcast %47 : f32 to vector<8x8x128xf32>
    %49 = arith.mulf %42, %48 : vector<8x8x128xf32>
    %50 = arith.addf %32, %49 : vector<8x8x128xf32>
    %c12 = arith.constant 12 : index
    %51 = memref.load %arg2[%c12] : memref<64xf32, #tpu.memory_space<smem>>
    %52 = vector.broadcast %51 : f32 to vector<8x8x128xf32>
    %53 = arith.mulf %42, %52 : vector<8x8x128xf32>
    %54 = arith.addf %36, %53 : vector<8x8x128xf32>
    %c14 = arith.constant 14 : index
    %55 = memref.load %arg2[%c14] : memref<64xf32, #tpu.memory_space<smem>>
    %56 = vector.broadcast %55 : f32 to vector<8x8x128xf32>
    %57 = arith.mulf %42, %56 : vector<8x8x128xf32>
    %58 = arith.addf %40, %57 : vector<8x8x128xf32>
    %c0_21 = arith.constant 0 : index
    %c1_22 = arith.constant 1 : index
    %c1_23 = arith.constant 1 : index
    %c0_24 = arith.constant 0 : index
    %c0_25 = arith.constant 0 : index
    %c0_26 = arith.constant 0 : index
    %59 = vector.load %arg1[%c0_21, %c1_22, %c1_23, %c0_24, %c0_25, %c0_26] : memref<4x2x2x8x8x128xf32, #tpu.memory_space<vmem>>, vector<1x1x1x8x8x128xf32>
    %60 = vector.shape_cast %59 : vector<1x1x1x8x8x128xf32> to vector<8x8x128xf32>
    %c5 = arith.constant 5 : index
    %61 = memref.load %arg2[%c5] : memref<64xf32, #tpu.memory_space<smem>>
    %62 = vector.broadcast %61 : f32 to vector<8x8x128xf32>
    %63 = arith.mulf %60, %62 : vector<8x8x128xf32>
    %64 = arith.addf %46, %63 : vector<8x8x128xf32>
    %c7 = arith.constant 7 : index
    %65 = memref.load %arg2[%c7] : memref<64xf32, #tpu.memory_space<smem>>
    %66 = vector.broadcast %65 : f32 to vector<8x8x128xf32>
    %67 = arith.mulf %60, %66 : vector<8x8x128xf32>
    %68 = arith.addf %50, %67 : vector<8x8x128xf32>
    %c13 = arith.constant 13 : index
    %69 = memref.load %arg2[%c13] : memref<64xf32, #tpu.memory_space<smem>>
    %70 = vector.broadcast %69 : f32 to vector<8x8x128xf32>
    %71 = arith.mulf %60, %70 : vector<8x8x128xf32>
    %72 = arith.addf %54, %71 : vector<8x8x128xf32>
    %c15 = arith.constant 15 : index
    %73 = memref.load %arg2[%c15] : memref<64xf32, #tpu.memory_space<smem>>
    %74 = vector.broadcast %73 : f32 to vector<8x8x128xf32>
    %75 = arith.mulf %60, %74 : vector<8x8x128xf32>
    %76 = arith.addf %58, %75 : vector<8x8x128xf32>
    %c1_27 = arith.constant 1 : index
    %c0_28 = arith.constant 0 : index
    %c0_29 = arith.constant 0 : index
    %c0_30 = arith.constant 0 : index
    %c0_31 = arith.constant 0 : index
    %c0_32 = arith.constant 0 : index
    %77 = vector.load %arg1[%c1_27, %c0_28, %c0_29, %c0_30, %c0_31, %c0_32] : memref<4x2x2x8x8x128xf32, #tpu.memory_space<vmem>>, vector<1x1x1x8x8x128xf32>
    %78 = vector.shape_cast %77 : vector<1x1x1x8x8x128xf32> to vector<8x8x128xf32>
    %c16 = arith.constant 16 : index
    %79 = memref.load %arg2[%c16] : memref<64xf32, #tpu.memory_space<smem>>
    %80 = vector.broadcast %79 : f32 to vector<8x8x128xf32>
    %81 = arith.mulf %78, %80 : vector<8x8x128xf32>
    %82 = arith.addf %64, %81 : vector<8x8x128xf32>
    %c18 = arith.constant 18 : index
    %83 = memref.load %arg2[%c18] : memref<64xf32, #tpu.memory_space<smem>>
    %84 = vector.broadcast %83 : f32 to vector<8x8x128xf32>
    %85 = arith.mulf %78, %84 : vector<8x8x128xf32>
    %86 = arith.addf %68, %85 : vector<8x8x128xf32>
    %c24 = arith.constant 24 : index
    %87 = memref.load %arg2[%c24] : memref<64xf32, #tpu.memory_space<smem>>
    %88 = vector.broadcast %87 : f32 to vector<8x8x128xf32>
    %89 = arith.mulf %78, %88 : vector<8x8x128xf32>
    %90 = arith.addf %72, %89 : vector<8x8x128xf32>
    %c26 = arith.constant 26 : index
    %91 = memref.load %arg2[%c26] : memref<64xf32, #tpu.memory_space<smem>>
    %92 = vector.broadcast %91 : f32 to vector<8x8x128xf32>
    %93 = arith.mulf %78, %92 : vector<8x8x128xf32>
    %94 = arith.addf %76, %93 : vector<8x8x128xf32>
    %c1_33 = arith.constant 1 : index
    %c0_34 = arith.constant 0 : index
    %c1_35 = arith.constant 1 : index
    %c0_36 = arith.constant 0 : index
    %c0_37 = arith.constant 0 : index
    %c0_38 = arith.constant 0 : index
    %95 = vector.load %arg1[%c1_33, %c0_34, %c1_35, %c0_36, %c0_37, %c0_38] : memref<4x2x2x8x8x128xf32, #tpu.memory_space<vmem>>, vector<1x1x1x8x8x128xf32>
    %96 = vector.shape_cast %95 : vector<1x1x1x8x8x128xf32> to vector<8x8x128xf32>
    %c17 = arith.constant 17 : index
    %97 = memref.load %arg2[%c17] : memref<64xf32, #tpu.memory_space<smem>>
    %98 = vector.broadcast %97 : f32 to vector<8x8x128xf32>
    %99 = arith.mulf %96, %98 : vector<8x8x128xf32>
    %100 = arith.addf %82, %99 : vector<8x8x128xf32>
    %c19 = arith.constant 19 : index
    %101 = memref.load %arg2[%c19] : memref<64xf32, #tpu.memory_space<smem>>
    %102 = vector.broadcast %101 : f32 to vector<8x8x128xf32>
    %103 = arith.mulf %96, %102 : vector<8x8x128xf32>
    %104 = arith.addf %86, %103 : vector<8x8x128xf32>
    %c25 = arith.constant 25 : index
    %105 = memref.load %arg2[%c25] : memref<64xf32, #tpu.memory_space<smem>>
    %106 = vector.broadcast %105 : f32 to vector<8x8x128xf32>
    %107 = arith.mulf %96, %106 : vector<8x8x128xf32>
    %108 = arith.addf %90, %107 : vector<8x8x128xf32>
    %c27 = arith.constant 27 : index
    %109 = memref.load %arg2[%c27] : memref<64xf32, #tpu.memory_space<smem>>
    %110 = vector.broadcast %109 : f32 to vector<8x8x128xf32>
    %111 = arith.mulf %96, %110 : vector<8x8x128xf32>
    %112 = arith.addf %94, %111 : vector<8x8x128xf32>
    %c1_39 = arith.constant 1 : index
    %c1_40 = arith.constant 1 : index
    %c0_41 = arith.constant 0 : index
    %c0_42 = arith.constant 0 : index
    %c0_43 = arith.constant 0 : index
    %c0_44 = arith.constant 0 : index
    %113 = vector.load %arg1[%c1_39, %c1_40, %c0_41, %c0_42, %c0_43, %c0_44] : memref<4x2x2x8x8x128xf32, #tpu.memory_space<vmem>>, vector<1x1x1x8x8x128xf32>
    %114 = vector.shape_cast %113 : vector<1x1x1x8x8x128xf32> to vector<8x8x128xf32>
    %c20 = arith.constant 20 : index
    %115 = memref.load %arg2[%c20] : memref<64xf32, #tpu.memory_space<smem>>
    %116 = vector.broadcast %115 : f32 to vector<8x8x128xf32>
    %117 = arith.mulf %114, %116 : vector<8x8x128xf32>
    %118 = arith.addf %100, %117 : vector<8x8x128xf32>
    %c22 = arith.constant 22 : index
    %119 = memref.load %arg2[%c22] : memref<64xf32, #tpu.memory_space<smem>>
    %120 = vector.broadcast %119 : f32 to vector<8x8x128xf32>
    %121 = arith.mulf %114, %120 : vector<8x8x128xf32>
    %122 = arith.addf %104, %121 : vector<8x8x128xf32>
    %c28 = arith.constant 28 : index
    %123 = memref.load %arg2[%c28] : memref<64xf32, #tpu.memory_space<smem>>
    %124 = vector.broadcast %123 : f32 to vector<8x8x128xf32>
    %125 = arith.mulf %114, %124 : vector<8x8x128xf32>
    %126 = arith.addf %108, %125 : vector<8x8x128xf32>
    %c30 = arith.constant 30 : index
    %127 = memref.load %arg2[%c30] : memref<64xf32, #tpu.memory_space<smem>>
    %128 = vector.broadcast %127 : f32 to vector<8x8x128xf32>
    %129 = arith.mulf %114, %128 : vector<8x8x128xf32>
    %130 = arith.addf %112, %129 : vector<8x8x128xf32>
    %c1_45 = arith.constant 1 : index
    %c1_46 = arith.constant 1 : index
    %c1_47 = arith.constant 1 : index
    %c0_48 = arith.constant 0 : index
    %c0_49 = arith.constant 0 : index
    %c0_50 = arith.constant 0 : index
    %131 = vector.load %arg1[%c1_45, %c1_46, %c1_47, %c0_48, %c0_49, %c0_50] : memref<4x2x2x8x8x128xf32, #tpu.memory_space<vmem>>, vector<1x1x1x8x8x128xf32>
    %132 = vector.shape_cast %131 : vector<1x1x1x8x8x128xf32> to vector<8x8x128xf32>
    %c21 = arith.constant 21 : index
    %133 = memref.load %arg2[%c21] : memref<64xf32, #tpu.memory_space<smem>>
    %134 = vector.broadcast %133 : f32 to vector<8x8x128xf32>
    %135 = arith.mulf %132, %134 : vector<8x8x128xf32>
    %136 = arith.addf %118, %135 : vector<8x8x128xf32>
    %c23 = arith.constant 23 : index
    %137 = memref.load %arg2[%c23] : memref<64xf32, #tpu.memory_space<smem>>
    %138 = vector.broadcast %137 : f32 to vector<8x8x128xf32>
    %139 = arith.mulf %132, %138 : vector<8x8x128xf32>
    %140 = arith.addf %122, %139 : vector<8x8x128xf32>
    %c29 = arith.constant 29 : index
    %141 = memref.load %arg2[%c29] : memref<64xf32, #tpu.memory_space<smem>>
    %142 = vector.broadcast %141 : f32 to vector<8x8x128xf32>
    %143 = arith.mulf %132, %142 : vector<8x8x128xf32>
    %144 = arith.addf %126, %143 : vector<8x8x128xf32>
    %c31 = arith.constant 31 : index
    %145 = memref.load %arg2[%c31] : memref<64xf32, #tpu.memory_space<smem>>
    %146 = vector.broadcast %145 : f32 to vector<8x8x128xf32>
    %147 = arith.mulf %132, %146 : vector<8x8x128xf32>
    %148 = arith.addf %130, %147 : vector<8x8x128xf32>
    %c2_51 = arith.constant 2 : index
    %c0_52 = arith.constant 0 : index
    %c0_53 = arith.constant 0 : index
    %c0_54 = arith.constant 0 : index
    %c0_55 = arith.constant 0 : index
    %c0_56 = arith.constant 0 : index
    %149 = vector.load %arg1[%c2_51, %c0_52, %c0_53, %c0_54, %c0_55, %c0_56] : memref<4x2x2x8x8x128xf32, #tpu.memory_space<vmem>>, vector<1x1x1x8x8x128xf32>
    %150 = vector.shape_cast %149 : vector<1x1x1x8x8x128xf32> to vector<8x8x128xf32>
    %c32 = arith.constant 32 : index
    %151 = memref.load %arg2[%c32] : memref<64xf32, #tpu.memory_space<smem>>
    %152 = vector.broadcast %151 : f32 to vector<8x8x128xf32>
    %153 = arith.mulf %150, %152 : vector<8x8x128xf32>
    %154 = arith.addf %136, %153 : vector<8x8x128xf32>
    %c34 = arith.constant 34 : index
    %155 = memref.load %arg2[%c34] : memref<64xf32, #tpu.memory_space<smem>>
    %156 = vector.broadcast %155 : f32 to vector<8x8x128xf32>
    %157 = arith.mulf %150, %156 : vector<8x8x128xf32>
    %158 = arith.addf %140, %157 : vector<8x8x128xf32>
    %c40 = arith.constant 40 : index
    %159 = memref.load %arg2[%c40] : memref<64xf32, #tpu.memory_space<smem>>
    %160 = vector.broadcast %159 : f32 to vector<8x8x128xf32>
    %161 = arith.mulf %150, %160 : vector<8x8x128xf32>
    %162 = arith.addf %144, %161 : vector<8x8x128xf32>
    %c42 = arith.constant 42 : index
    %163 = memref.load %arg2[%c42] : memref<64xf32, #tpu.memory_space<smem>>
    %164 = vector.broadcast %163 : f32 to vector<8x8x128xf32>
    %165 = arith.mulf %150, %164 : vector<8x8x128xf32>
    %166 = arith.addf %148, %165 : vector<8x8x128xf32>
    %c2_57 = arith.constant 2 : index
    %c0_58 = arith.constant 0 : index
    %c1_59 = arith.constant 1 : index
    %c0_60 = arith.constant 0 : index
    %c0_61 = arith.constant 0 : index
    %c0_62 = arith.constant 0 : index
    %167 = vector.load %arg1[%c2_57, %c0_58, %c1_59, %c0_60, %c0_61, %c0_62] : memref<4x2x2x8x8x128xf32, #tpu.memory_space<vmem>>, vector<1x1x1x8x8x128xf32>
    %168 = vector.shape_cast %167 : vector<1x1x1x8x8x128xf32> to vector<8x8x128xf32>
    %c33 = arith.constant 33 : index
    %169 = memref.load %arg2[%c33] : memref<64xf32, #tpu.memory_space<smem>>
    %170 = vector.broadcast %169 : f32 to vector<8x8x128xf32>
    %171 = arith.mulf %168, %170 : vector<8x8x128xf32>
    %172 = arith.addf %154, %171 : vector<8x8x128xf32>
    %c35 = arith.constant 35 : index
    %173 = memref.load %arg2[%c35] : memref<64xf32, #tpu.memory_space<smem>>
    %174 = vector.broadcast %173 : f32 to vector<8x8x128xf32>
    %175 = arith.mulf %168, %174 : vector<8x8x128xf32>
    %176 = arith.addf %158, %175 : vector<8x8x128xf32>
    %c41 = arith.constant 41 : index
    %177 = memref.load %arg2[%c41] : memref<64xf32, #tpu.memory_space<smem>>
    %178 = vector.broadcast %177 : f32 to vector<8x8x128xf32>
    %179 = arith.mulf %168, %178 : vector<8x8x128xf32>
    %180 = arith.addf %162, %179 : vector<8x8x128xf32>
    %c43 = arith.constant 43 : index
    %181 = memref.load %arg2[%c43] : memref<64xf32, #tpu.memory_space<smem>>
    %182 = vector.broadcast %181 : f32 to vector<8x8x128xf32>
    %183 = arith.mulf %168, %182 : vector<8x8x128xf32>
    %184 = arith.addf %166, %183 : vector<8x8x128xf32>
    %c2_63 = arith.constant 2 : index
    %c1_64 = arith.constant 1 : index
    %c0_65 = arith.constant 0 : index
    %c0_66 = arith.constant 0 : index
    %c0_67 = arith.constant 0 : index
    %c0_68 = arith.constant 0 : index
    %185 = vector.load %arg1[%c2_63, %c1_64, %c0_65, %c0_66, %c0_67, %c0_68] : memref<4x2x2x8x8x128xf32, #tpu.memory_space<vmem>>, vector<1x1x1x8x8x128xf32>
    %186 = vector.shape_cast %185 : vector<1x1x1x8x8x128xf32> to vector<8x8x128xf32>
    %c36 = arith.constant 36 : index
    %187 = memref.load %arg2[%c36] : memref<64xf32, #tpu.memory_space<smem>>
    %188 = vector.broadcast %187 : f32 to vector<8x8x128xf32>
    %189 = arith.mulf %186, %188 : vector<8x8x128xf32>
    %190 = arith.addf %172, %189 : vector<8x8x128xf32>
    %c38 = arith.constant 38 : index
    %191 = memref.load %arg2[%c38] : memref<64xf32, #tpu.memory_space<smem>>
    %192 = vector.broadcast %191 : f32 to vector<8x8x128xf32>
    %193 = arith.mulf %186, %192 : vector<8x8x128xf32>
    %194 = arith.addf %176, %193 : vector<8x8x128xf32>
    %c44 = arith.constant 44 : index
    %195 = memref.load %arg2[%c44] : memref<64xf32, #tpu.memory_space<smem>>
    %196 = vector.broadcast %195 : f32 to vector<8x8x128xf32>
    %197 = arith.mulf %186, %196 : vector<8x8x128xf32>
    %198 = arith.addf %180, %197 : vector<8x8x128xf32>
    %c46 = arith.constant 46 : index
    %199 = memref.load %arg2[%c46] : memref<64xf32, #tpu.memory_space<smem>>
    %200 = vector.broadcast %199 : f32 to vector<8x8x128xf32>
    %201 = arith.mulf %186, %200 : vector<8x8x128xf32>
    %202 = arith.addf %184, %201 : vector<8x8x128xf32>
    %c2_69 = arith.constant 2 : index
    %c1_70 = arith.constant 1 : index
    %c1_71 = arith.constant 1 : index
    %c0_72 = arith.constant 0 : index
    %c0_73 = arith.constant 0 : index
    %c0_74 = arith.constant 0 : index
    %203 = vector.load %arg1[%c2_69, %c1_70, %c1_71, %c0_72, %c0_73, %c0_74] : memref<4x2x2x8x8x128xf32, #tpu.memory_space<vmem>>, vector<1x1x1x8x8x128xf32>
    %204 = vector.shape_cast %203 : vector<1x1x1x8x8x128xf32> to vector<8x8x128xf32>
    %c37 = arith.constant 37 : index
    %205 = memref.load %arg2[%c37] : memref<64xf32, #tpu.memory_space<smem>>
    %206 = vector.broadcast %205 : f32 to vector<8x8x128xf32>
    %207 = arith.mulf %204, %206 : vector<8x8x128xf32>
    %208 = arith.addf %190, %207 : vector<8x8x128xf32>
    %c39 = arith.constant 39 : index
    %209 = memref.load %arg2[%c39] : memref<64xf32, #tpu.memory_space<smem>>
    %210 = vector.broadcast %209 : f32 to vector<8x8x128xf32>
    %211 = arith.mulf %204, %210 : vector<8x8x128xf32>
    %212 = arith.addf %194, %211 : vector<8x8x128xf32>
    %c45 = arith.constant 45 : index
    %213 = memref.load %arg2[%c45] : memref<64xf32, #tpu.memory_space<smem>>
    %214 = vector.broadcast %213 : f32 to vector<8x8x128xf32>
    %215 = arith.mulf %204, %214 : vector<8x8x128xf32>
    %216 = arith.addf %198, %215 : vector<8x8x128xf32>
    %c47 = arith.constant 47 : index
    %217 = memref.load %arg2[%c47] : memref<64xf32, #tpu.memory_space<smem>>
    %218 = vector.broadcast %217 : f32 to vector<8x8x128xf32>
    %219 = arith.mulf %204, %218 : vector<8x8x128xf32>
    %220 = arith.addf %202, %219 : vector<8x8x128xf32>
    %c3_75 = arith.constant 3 : index
    %c0_76 = arith.constant 0 : index
    %c0_77 = arith.constant 0 : index
    %c0_78 = arith.constant 0 : index
    %c0_79 = arith.constant 0 : index
    %c0_80 = arith.constant 0 : index
    %221 = vector.load %arg1[%c3_75, %c0_76, %c0_77, %c0_78, %c0_79, %c0_80] : memref<4x2x2x8x8x128xf32, #tpu.memory_space<vmem>>, vector<1x1x1x8x8x128xf32>
    %222 = vector.shape_cast %221 : vector<1x1x1x8x8x128xf32> to vector<8x8x128xf32>
    %c48 = arith.constant 48 : index
    %223 = memref.load %arg2[%c48] : memref<64xf32, #tpu.memory_space<smem>>
    %224 = vector.broadcast %223 : f32 to vector<8x8x128xf32>
    %225 = arith.mulf %222, %224 : vector<8x8x128xf32>
    %226 = arith.addf %208, %225 : vector<8x8x128xf32>
    %c50 = arith.constant 50 : index
    %227 = memref.load %arg2[%c50] : memref<64xf32, #tpu.memory_space<smem>>
    %228 = vector.broadcast %227 : f32 to vector<8x8x128xf32>
    %229 = arith.mulf %222, %228 : vector<8x8x128xf32>
    %230 = arith.addf %212, %229 : vector<8x8x128xf32>
    %c56 = arith.constant 56 : index
    %231 = memref.load %arg2[%c56] : memref<64xf32, #tpu.memory_space<smem>>
    %232 = vector.broadcast %231 : f32 to vector<8x8x128xf32>
    %233 = arith.mulf %222, %232 : vector<8x8x128xf32>
    %234 = arith.addf %216, %233 : vector<8x8x128xf32>
    %c58 = arith.constant 58 : index
    %235 = memref.load %arg2[%c58] : memref<64xf32, #tpu.memory_space<smem>>
    %236 = vector.broadcast %235 : f32 to vector<8x8x128xf32>
    %237 = arith.mulf %222, %236 : vector<8x8x128xf32>
    %238 = arith.addf %220, %237 : vector<8x8x128xf32>
    %c3_81 = arith.constant 3 : index
    %c0_82 = arith.constant 0 : index
    %c1_83 = arith.constant 1 : index
    %c0_84 = arith.constant 0 : index
    %c0_85 = arith.constant 0 : index
    %c0_86 = arith.constant 0 : index
    %239 = vector.load %arg1[%c3_81, %c0_82, %c1_83, %c0_84, %c0_85, %c0_86] : memref<4x2x2x8x8x128xf32, #tpu.memory_space<vmem>>, vector<1x1x1x8x8x128xf32>
    %240 = vector.shape_cast %239 : vector<1x1x1x8x8x128xf32> to vector<8x8x128xf32>
    %c49 = arith.constant 49 : index
    %241 = memref.load %arg2[%c49] : memref<64xf32, #tpu.memory_space<smem>>
    %242 = vector.broadcast %241 : f32 to vector<8x8x128xf32>
    %243 = arith.mulf %240, %242 : vector<8x8x128xf32>
    %244 = arith.addf %226, %243 : vector<8x8x128xf32>
    %c51 = arith.constant 51 : index
    %245 = memref.load %arg2[%c51] : memref<64xf32, #tpu.memory_space<smem>>
    %246 = vector.broadcast %245 : f32 to vector<8x8x128xf32>
    %247 = arith.mulf %240, %246 : vector<8x8x128xf32>
    %248 = arith.addf %230, %247 : vector<8x8x128xf32>
    %c57 = arith.constant 57 : index
    %249 = memref.load %arg2[%c57] : memref<64xf32, #tpu.memory_space<smem>>
    %250 = vector.broadcast %249 : f32 to vector<8x8x128xf32>
    %251 = arith.mulf %240, %250 : vector<8x8x128xf32>
    %252 = arith.addf %234, %251 : vector<8x8x128xf32>
    %c59 = arith.constant 59 : index
    %253 = memref.load %arg2[%c59] : memref<64xf32, #tpu.memory_space<smem>>
    %254 = vector.broadcast %253 : f32 to vector<8x8x128xf32>
    %255 = arith.mulf %240, %254 : vector<8x8x128xf32>
    %256 = arith.addf %238, %255 : vector<8x8x128xf32>
    %c3_87 = arith.constant 3 : index
    %c1_88 = arith.constant 1 : index
    %c0_89 = arith.constant 0 : index
    %c0_90 = arith.constant 0 : index
    %c0_91 = arith.constant 0 : index
    %c0_92 = arith.constant 0 : index
    %257 = vector.load %arg1[%c3_87, %c1_88, %c0_89, %c0_90, %c0_91, %c0_92] : memref<4x2x2x8x8x128xf32, #tpu.memory_space<vmem>>, vector<1x1x1x8x8x128xf32>
    %258 = vector.shape_cast %257 : vector<1x1x1x8x8x128xf32> to vector<8x8x128xf32>
    %c52 = arith.constant 52 : index
    %259 = memref.load %arg2[%c52] : memref<64xf32, #tpu.memory_space<smem>>
    %260 = vector.broadcast %259 : f32 to vector<8x8x128xf32>
    %261 = arith.mulf %258, %260 : vector<8x8x128xf32>
    %262 = arith.addf %244, %261 : vector<8x8x128xf32>
    %c54 = arith.constant 54 : index
    %263 = memref.load %arg2[%c54] : memref<64xf32, #tpu.memory_space<smem>>
    %264 = vector.broadcast %263 : f32 to vector<8x8x128xf32>
    %265 = arith.mulf %258, %264 : vector<8x8x128xf32>
    %266 = arith.addf %248, %265 : vector<8x8x128xf32>
    %c60 = arith.constant 60 : index
    %267 = memref.load %arg2[%c60] : memref<64xf32, #tpu.memory_space<smem>>
    %268 = vector.broadcast %267 : f32 to vector<8x8x128xf32>
    %269 = arith.mulf %258, %268 : vector<8x8x128xf32>
    %270 = arith.addf %252, %269 : vector<8x8x128xf32>
    %c62 = arith.constant 62 : index
    %271 = memref.load %arg2[%c62] : memref<64xf32, #tpu.memory_space<smem>>
    %272 = vector.broadcast %271 : f32 to vector<8x8x128xf32>
    %273 = arith.mulf %258, %272 : vector<8x8x128xf32>
    %274 = arith.addf %256, %273 : vector<8x8x128xf32>
    %c3_93 = arith.constant 3 : index
    %c1_94 = arith.constant 1 : index
    %c1_95 = arith.constant 1 : index
    %c0_96 = arith.constant 0 : index
    %c0_97 = arith.constant 0 : index
    %c0_98 = arith.constant 0 : index
    %275 = vector.load %arg1[%c3_93, %c1_94, %c1_95, %c0_96, %c0_97, %c0_98] : memref<4x2x2x8x8x128xf32, #tpu.memory_space<vmem>>, vector<1x1x1x8x8x128xf32>
    %276 = vector.shape_cast %275 : vector<1x1x1x8x8x128xf32> to vector<8x8x128xf32>
    %c53 = arith.constant 53 : index
    %277 = memref.load %arg2[%c53] : memref<64xf32, #tpu.memory_space<smem>>
    %278 = vector.broadcast %277 : f32 to vector<8x8x128xf32>
    %279 = arith.mulf %276, %278 : vector<8x8x128xf32>
    %280 = arith.addf %262, %279 : vector<8x8x128xf32>
    %c55 = arith.constant 55 : index
    %281 = memref.load %arg2[%c55] : memref<64xf32, #tpu.memory_space<smem>>
    %282 = vector.broadcast %281 : f32 to vector<8x8x128xf32>
    %283 = arith.mulf %276, %282 : vector<8x8x128xf32>
    %284 = arith.addf %266, %283 : vector<8x8x128xf32>
    %c61 = arith.constant 61 : index
    %285 = memref.load %arg2[%c61] : memref<64xf32, #tpu.memory_space<smem>>
    %286 = vector.broadcast %285 : f32 to vector<8x8x128xf32>
    %287 = arith.mulf %276, %286 : vector<8x8x128xf32>
    %288 = arith.addf %270, %287 : vector<8x8x128xf32>
    %c63 = arith.constant 63 : index
    %289 = memref.load %arg2[%c63] : memref<64xf32, #tpu.memory_space<smem>>
    %290 = vector.broadcast %289 : f32 to vector<8x8x128xf32>
    %291 = arith.mulf %276, %290 : vector<8x8x128xf32>
    %292 = arith.addf %274, %291 : vector<8x8x128xf32>
    %293 = vector.extract_strided_slice %280 {offsets = [0, 0, 0], sizes = [7, 7, 128], strides = [1, 1, 1]} : vector<8x8x128xf32> to vector<7x7x128xf32>
    %294 = vector.extract_strided_slice %284 {offsets = [0, 1, 0], sizes = [7, 7, 128], strides = [1, 1, 1]} : vector<8x8x128xf32> to vector<7x7x128xf32>
    %295 = arith.addf %293, %294 : vector<7x7x128xf32>
    %296 = vector.extract_strided_slice %288 {offsets = [1, 0, 0], sizes = [7, 7, 128], strides = [1, 1, 1]} : vector<8x8x128xf32> to vector<7x7x128xf32>
    %297 = arith.addf %295, %296 : vector<7x7x128xf32>
    %298 = vector.extract_strided_slice %292 {offsets = [1, 1, 0], sizes = [7, 7, 128], strides = [1, 1, 1]} : vector<8x8x128xf32> to vector<7x7x128xf32>
    %299 = arith.addf %297, %298 : vector<7x7x128xf32>
    %300 = arith.negf %299 : vector<7x7x128xf32>
    %301 = math.exp %300 : vector<7x7x128xf32>
    %cst_99 = arith.constant 1.000000e+00 : f32
    %302 = vector.broadcast %cst_99 : f32 to vector<7x7x128xf32>
    %303 = arith.addf %302, %301 : vector<7x7x128xf32>
    %304 = arith.divf %302, %303 : vector<7x7x128xf32>
    %c0_100 = arith.constant 0 : index
    %c0_101 = arith.constant 0 : index
    %c0_102 = arith.constant 0 : index
    %305 = vector.load %arg4[%c0_100, %c0_101, %c0_102] : memref<7x7x128xf32, #tpu.memory_space<vmem>>, vector<7x7x128xf32>
    tpu.vector_store %arg4[%c0_100, %c0_101, %c0_102], %304 {strides = array<i32>} : memref<7x7x128xf32, #tpu.memory_space<vmem>>, vector<7x7x128xf32>,
    return
  }
  func.func @transform_0(%arg0: i32) -> (i32, i32, i32, i32, i32, i32) {
    %c0_i32 = arith.constant 0 : i32
    %c0_i32_0 = arith.constant 0 : i32
    %c0_i32_1 = arith.constant 0 : i32
    %c0_i32_2 = arith.constant 0 : i32
    %c0_i32_3 = arith.constant 0 : i32
    %c0_i32_4 = arith.constant 0 : i32
    return %c0_i32, %c0_i32_0, %c0_i32_1, %c0_i32_2, %c0_i32_3, %arg0 : i32, i32, i32, i32, i32, i32
  }
  func.func @transform_1(%arg0: i32) -> i32 {
    %c0_i32 = arith.constant 0 : i32
    %c0_i32_0 = arith.constant 0 : i32
    return %c0_i32 : i32
  }
  func.func @transform_2(%arg0: i32) -> i32 {
    %c0_i32 = arith.constant 0 : i32
    %c0_i32_0 = arith.constant 0 : i32
    return %c0_i32 : i32
  }
  func.func @transform_3(%arg0: i32) -> (i32, i32, i32) {
    %c0_i32 = arith.constant 0 : i32
    %c0_i32_0 = arith.constant 0 : i32
    %c0_i32_1 = arith.constant 0 : i32
    return %c0_i32, %c0_i32_0, %arg0 : i32, i32, i32
  }
}

</mosaic_0001>

<llo_original>
// kernel: tpu_custom_call.1
$region0: #{tpu_custom_call.1}
  #allocation0 [shape = 'u32[]', space=smem, size = 0x4, offset = 0x4, fixed_abs, tag = 'smem constant byte address 0x4 - core index']
  #allocation1 [shape = 'u32[144,128]{1,0:T(1,128)}', space=vmem, size = 0x12000, scoped, tag = 'internal scratch']
  #allocation2 [shape = 'f32[1]{0:T(128)S(6)}', space=smem, size = 0x200, scoped, tag = 'scoped memory for tpu_custom_call.1']
  %s0 = inlined_call_operand.hbm [shape: f32[4,2,2,8,8,128], index: 0, kind: input, shape index: {}]
  %s1 = inlined_call_operand.vmem [shape: f32[64], index: 1, kind: input, shape index: {}]
  %s2 = inlined_call_operand.<no memory space> [shape: f32[1], index: 2, kind: input, shape index: {}]
  %s3 = inlined_call_operand.hbm [shape: f32[7,7,128], index: 3, kind: output, shape index: {}]
  %s4 = sld [smem:[#allocation0]]
  $region30: #{tpu_custom_call.1} parent=0
    _
  %s6 = ssub.s32 1, %s4
  %s7 = scalar_select 0, %s6, %s4
  %8 = sst [smem:[#allocation2]] %s2
  $region1: #{tpu_custom_call.1} parent=0
    #allocation3 [shape = 'u8[524288]{0}', space=vmem, size = 0x80000, scoped, tag = 'input window, operand 0, single buffered']
    #allocation4 [shape = 's32[1]{0}', space=sflag, size = 0x4, scoped, tag = 'scoped memory for tpu_custom_call.1']
    #allocation5 [shape = 's32[1]{0}', space=sflag, size = 0x4, scoped, tag = 'scoped memory for tpu_custom_call.1']
    #allocation6 [shape = 's32[1]{0}', space=sflag, size = 0x4, scoped, tag = 'scoped memory for tpu_custom_call.1']
    #allocation7 [shape = 'u8[512]{0}', space=smem, size = 0x200, scoped, tag = 'input window, operand 1, single buffered']
    #allocation8 [shape = 'u8[28672]{0}', space=vmem, size = 0x7000, scoped, tag = 'output window, operand 0, single buffered']
    %9 = vsyncpa [#allocation4], 0
    %10 = vsyncpa [#allocation6], 0
    %11 = vsyncpa [#allocation5], 0
    // Predicated region
    $region2: #{tpu_custom_call.1} parent=1 // pred_check
      _
    $region3: #{tpu_custom_call.1} parent=1 // pred_check_branch
      %13 = sbr.rel (0) target = $region5
    $region4: #{tpu_custom_call.1} parent=1 // pred_region
      %s15 = ssub.s32 16384, 16384
      %16 = vsyncadd [#allocation4], %s15
      %s17 = sshll.u32 [#allocation3], 4
      %s18 = int_to_ptr.vmem [resolvable:$true] %s17
      %23 = dma.hbm_to_vmem [thread:$0]  %s0, 16384, %s18, [#allocation4], 128, 128, 8
    $region5: #{tpu_custom_call.1} parent=1 // pred_fallthru
      _
    // Predicated region
    $region6: #{tpu_custom_call.1} parent=1 // pred_check
      _
    $region7: #{tpu_custom_call.1} parent=1 // pred_check_branch
      %25 = sbr.rel (0) target = $region9
    $region8: #{tpu_custom_call.1} parent=1 // pred_region
      %s27 = ssub.s32 16, 16
      %28 = vsyncadd [#allocation6], %s27
      %s30 = sshll.u32 %s1, 4
      %s31 = int_to_ptr.vmem [resolvable:$true] %s30
      %33 = dma.vmem_to_smem %s31, 16, [#allocation7], [#allocation6]
    $region9: #{tpu_custom_call.1} parent=1 // pred_fallthru
      _
    // Predicated region
    $region10: #{tpu_custom_call.1} parent=1 // pred_check
      _
    $region11: #{tpu_custom_call.1} parent=1 // pred_check_branch
      %35 = sbr.rel (0) target = $region13
    $region12: #{tpu_custom_call.1} parent=1 // pred_region
      _
    $region13: #{tpu_custom_call.1} parent=1 // pred_fallthru
      _
    // Predicated region
    $region14: #{tpu_custom_call.1} parent=1 // pred_check
      _
    $region15: #{tpu_custom_call.1} parent=1 // pred_check_branch
      %37 = sbr.rel (0) target = $region17
    $region16: #{tpu_custom_call.1} parent=1 // pred_region
      %38 = dma.done [#allocation4], 16384
    $region17: #{tpu_custom_call.1} parent=1 // pred_fallthru
      _
    // Predicated region
    $region18: #{tpu_custom_call.1} parent=1 // pred_check
      _
    $region19: #{tpu_custom_call.1} parent=1 // pred_check_branch
      %40 = sbr.rel (0) target = $region21
    $region20: #{tpu_custom_call.1} parent=1 // pred_region
      %41 = dma.done [#allocation6], 16
    $region21: #{tpu_custom_call.1} parent=1 // pred_fallthru
      _
    %42 = sfence
    %s43 = sld [smem:[#allocation2]]
    %v44 = vstv %s43
    %v45 = vld [vmem:[#allocation3] sm:$0xff]
    %v46 = vld [vmem:[#allocation3 + $0x8] sm:$0xff]
    %v47 = vld [vmem:[#allocation3 + $0x10] sm:$0xff]
    %v48 = vld [vmem:[#allocation3 + $0x18] sm:$0xff]
    %v49 = vld [vmem:[#allocation3 + $0x20] sm:$0xff]
    %v50 = vld [vmem:[#allocation3 + $0x28] sm:$0xff]
    %v51 = vld [vmem:[#allocation3 + $0x30] sm:$0xff]
    %v52 = vld [vmem:[#allocation3 + $0x38] sm:$0xff]
    %s53 = sld [smem:[#allocation7]]
    %v54 = vstv %s53
    %v55 = vmul.f32 %v45, %v54
    %v56 = vmul.f32 %v46, %v54
    %v57 = vmul.f32 %v47, %v54
    %v58 = vmul.f32 %v48, %v54
    %v59 = vmul.f32 %v49, %v54
    %v60 = vmul.f32 %v50, %v54
    %v61 = vmul.f32 %v51, %v54
    %v62 = vadd.f32 %v44, %v55
    %v63 = vadd.f32 %v44, %v56
    %v64 = vadd.f32 %v44, %v57
    %v65 = vadd.f32 %v44, %v58
    %v66 = vadd.f32 %v44, %v59
    %v67 = vadd.f32 %v44, %v60
    %v68 = vadd.f32 %v44, %v61
    %s69 = sld [smem:[#allocation7 + $0x2]]
    %v70 = vstv %s69
    %v71 = vmul.f32 %v45, %v70
    %v72 = vmul.f32 %v46, %v70
    %v73 = vmul.f32 %v47, %v70
    %v74 = vmul.f32 %v48, %v70
    %v75 = vmul.f32 %v49, %v70
    %v76 = vmul.f32 %v50, %v70
    %v77 = vmul.f32 %v51, %v70
    %v78 = vadd.f32 %v71, 0.0
    %v79 = vadd.f32 %v72, 0.0
    %v80 = vadd.f32 %v73, 0.0
    %v81 = vadd.f32 %v74, 0.0
    %v82 = vadd.f32 %v75, 0.0
    %v83 = vadd.f32 %v76, 0.0
    %v84 = vadd.f32 %v77, 0.0
    %s85 = sld [smem:[#allocation7 + $0x8]]
    %v86 = vstv %s85
    %v87 = vmul.f32 %v46, %v86
    %v88 = vmul.f32 %v47, %v86
    %v89 = vmul.f32 %v48, %v86
    %v90 = vmul.f32 %v49, %v86
    %v91 = vmul.f32 %v50, %v86
    %v92 = vmul.f32 %v51, %v86
    %v93 = vmul.f32 %v52, %v86
    %v94 = vadd.f32 %v87, 0.0
    %v95 = vadd.f32 %v88, 0.0
    %v96 = vadd.f32 %v89, 0.0
    %v97 = vadd.f32 %v90, 0.0
    %v98 = vadd.f32 %v91, 0.0
    %v99 = vadd.f32 %v92, 0.0
    %v100 = vadd.f32 %v93, 0.0
    %s101 = sld [smem:[#allocation7 + $0xa]]
    %v102 = vstv %s101
    %v103 = vmul.f32 %v46, %v102
    %v104 = vmul.f32 %v47, %v102
    %v105 = vmul.f32 %v48, %v102
    %v106 = vmul.f32 %v49, %v102
    %v107 = vmul.f32 %v50, %v102
    %v108 = vmul.f32 %v51, %v102
    %v109 = vmul.f32 %v52, %v102
    %v110 = vadd.f32 %v103, 0.0
    %v111 = vadd.f32 %v104, 0.0
    %v112 = vadd.f32 %v105, 0.0
    %v113 = vadd.f32 %v106, 0.0
    %v114 = vadd.f32 %v107, 0.0
    %v115 = vadd.f32 %v108, 0.0
    %v116 = vadd.f32 %v109, 0.0
    %s117 = scalar_lea.vmem [#allocation3], 64
    %v118 = vld [vmem:[%s117] sm:$0xff]
    %v119 = vld [vmem:[%s117 + $0x8] sm:$0xff]
    %v120 = vld [vmem:[%s117 + $0x10] sm:$0xff]
    %v121 = vld [vmem:[%s117 + $0x18] sm:$0xff]
    %v122 = vld [vmem:[%s117 + $0x20] sm:$0xff]
    %v123 = vld [vmem:[%s117 + $0x28] sm:$0xff]
    %v124 = vld [vmem:[%s117 + $0x30] sm:$0xff]
    %v125 = vld [vmem:[%s117 + $0x38] sm:$0xff]
    %s126 = sld [smem:[#allocation7 + $0x1]]
    %v127 = vstv %s126
    %v128 = vmul.f32 %v118, %v127
    %v129 = vmul.f32 %v119, %v127
    %v130 = vmul.f32 %v120, %v127
    %v131 = vmul.f32 %v121, %v127
    %v132 = vmul.f32 %v122, %v127
    %v133 = vmul.f32 %v123, %v127
    %v134 = vmul.f32 %v124, %v127
    %v135 = vadd.f32 %v62, %v128
    %v136 = vadd.f32 %v63, %v129
    %v137 = vadd.f32 %v64, %v130
    %v138 = vadd.f32 %v65, %v131
    %v139 = vadd.f32 %v66, %v132
    %v140 = vadd.f32 %v67, %v133
    %v141 = vadd.f32 %v68, %v134
    %s142 = sld [smem:[#allocation7 + $0x3]]
    %v143 = vstv %s142
    %v144 = vmul.f32 %v118, %v143
    %v145 = vmul.f32 %v119, %v143
    %v146 = vmul.f32 %v120, %v143
    %v147 = vmul.f32 %v121, %v143
    %v148 = vmul.f32 %v122, %v143
    %v149 = vmul.f32 %v123, %v143
    %v150 = vmul.f32 %v124, %v143
    %v151 = vadd.f32 %v78, %v144
    %v152 = vadd.f32 %v79, %v145
    %v153 = vadd.f32 %v80, %v146
    %v154 = vadd.f32 %v81, %v147
    %v155 = vadd.f32 %v82, %v148
    %v156 = vadd.f32 %v83, %v149
    %v157 = vadd.f32 %v84, %v150
    %s158 = sld [smem:[#allocation7 + $0x9]]
    %v159 = vstv %s158
    %v160 = vmul.f32 %v119, %v159
    %v161 = vmul.f32 %v120, %v159
    %v162 = vmul.f32 %v121, %v159
    %v163 = vmul.f32 %v122, %v159
    %v164 = vmul.f32 %v123, %v159
    %v165 = vmul.f32 %v124, %v159
    %v166 = vmul.f32 %v125, %v159
    %v167 = vadd.f32 %v94, %v160
    %v168 = vadd.f32 %v95, %v161
    %v169 = vadd.f32 %v96, %v162
    %v170 = vadd.f32 %v97, %v163
    %v171 = vadd.f32 %v98, %v164
    %v172 = vadd.f32 %v99, %v165
    %v173 = vadd.f32 %v100, %v166
    %s174 = sld [smem:[#allocation7 + $0xb]]
    %v175 = vstv %s174
    %v176 = vmul.f32 %v119, %v175
    %v177 = vmul.f32 %v120, %v175
    %v178 = vmul.f32 %v121, %v175
    %v179 = vmul.f32 %v122, %v175
    %v180 = vmul.f32 %v123, %v175
    %v181 = vmul.f32 %v124, %v175
    %v182 = vmul.f32 %v125, %v175
    %v183 = vadd.f32 %v110, %v176
    %v184 = vadd.f32 %v111, %v177
    %v185 = vadd.f32 %v112, %v178
    %v186 = vadd.f32 %v113, %v179
    %v187 = vadd.f32 %v114, %v180
    %v188 = vadd.f32 %v115, %v181
    %v189 = vadd.f32 %v116, %v182
    %s190 = scalar_lea.vmem [#allocation3], 128
    %v191 = vld [vmem:[%s190] sm:$0xff]
    %v192 = vld [vmem:[%s190 + $0x8] sm:$0xff]
    %v193 = vld [vmem:[%s190 + $0x10] sm:$0xff]
    %v194 = vld [vmem:[%s190 + $0x18] sm:$0xff]
    %v195 = vld [vmem:[%s190 + $0x20] sm:$0xff]
    %v196 = vld [vmem:[%s190 + $0x28] sm:$0xff]
    %v197 = vld [vmem:[%s190 + $0x30] sm:$0xff]
    %v198 = vld [vmem:[%s190 + $0x38] sm:$0xff]
    %s199 = sld [smem:[#allocation7 + $0x4]]
    %v200 = vstv %s199
    %v201 = vmul.f32 %v191, %v200
    %v202 = vmul.f32 %v192, %v200
    %v203 = vmul.f32 %v193, %v200
    %v204 = vmul.f32 %v194, %v200
    %v205 = vmul.f32 %v195, %v200
    %v206 = vmul.f32 %v196, %v200
    %v207 = vmul.f32 %v197, %v200
    %v208 = vadd.f32 %v135, %v201
    %v209 = vadd.f32 %v136, %v202
    %v210 = vadd.f32 %v137, %v203
    %v211 = vadd.f32 %v138, %v204
    %v212 = vadd.f32 %v139, %v205
    %v213 = vadd.f32 %v140, %v206
    %v214 = vadd.f32 %v141, %v207
    %s215 = sld [smem:[#allocation7 + $0x6]]
    %v216 = vstv %s215
    %v217 = vmul.f32 %v191, %v216
    %v218 = vmul.f32 %v192, %v216
    %v219 = vmul.f32 %v193, %v216
    %v220 = vmul.f32 %v194, %v216
    %v221 = vmul.f32 %v195, %v216
    %v222 = vmul.f32 %v196, %v216
    %v223 = vmul.f32 %v197, %v216
    %v224 = vadd.f32 %v151, %v217
    %v225 = vadd.f32 %v152, %v218
    %v226 = vadd.f32 %v153, %v219
    %v227 = vadd.f32 %v154, %v220
    %v228 = vadd.f32 %v155, %v221
    %v229 = vadd.f32 %v156, %v222
    %v230 = vadd.f32 %v157, %v223
    %s231 = sld [smem:[#allocation7 + $0xc]]
    %v232 = vstv %s231
    %v233 = vmul.f32 %v192, %v232
    %v234 = vmul.f32 %v193, %v232
    %v235 = vmul.f32 %v194, %v232
    %v236 = vmul.f32 %v195, %v232
    %v237 = vmul.f32 %v196, %v232
    %v238 = vmul.f32 %v197, %v232
    %v239 = vmul.f32 %v198, %v232
    %v240 = vadd.f32 %v167, %v233
    %v241 = vadd.f32 %v168, %v234
    %v242 = vadd.f32 %v169, %v235
    %v243 = vadd.f32 %v170, %v236
    %v244 = vadd.f32 %v171, %v237
    %v245 = vadd.f32 %v172, %v238
    %v246 = vadd.f32 %v173, %v239
    %s247 = sld [smem:[#allocation7 + $0xe]]
    %v248 = vstv %s247
    %v249 = vmul.f32 %v192, %v248
    %v250 = vmul.f32 %v193, %v248
    %v251 = vmul.f32 %v194, %v248
    %v252 = vmul.f32 %v195, %v248
    %v253 = vmul.f32 %v196, %v248
    %v254 = vmul.f32 %v197, %v248
    %v255 = vmul.f32 %v198, %v248
    %v256 = vadd.f32 %v183, %v249
    %v257 = vadd.f32 %v184, %v250
    %v258 = vadd.f32 %v185, %v251
    %v259 = vadd.f32 %v186, %v252
    %v260 = vadd.f32 %v187, %v253
    %v261 = vadd.f32 %v188, %v254
    %v262 = vadd.f32 %v189, %v255
    %s263 = scalar_lea.vmem [#allocation3], 192
    %v264 = vld [vmem:[%s263] sm:$0xff]
    %v265 = vld [vmem:[%s263 + $0x8] sm:$0xff]
    %v266 = vld [vmem:[%s263 + $0x10] sm:$0xff]
    %v267 = vld [vmem:[%s263 + $0x18] sm:$0xff]
    %v268 = vld [vmem:[%s263 + $0x20] sm:$0xff]
    %v269 = vld [vmem:[%s263 + $0x28] sm:$0xff]
    %v270 = vld [vmem:[%s263 + $0x30] sm:$0xff]
    %v271 = vld [vmem:[%s263 + $0x38] sm:$0xff]
    %s272 = sld [smem:[#allocation7 + $0x5]]
    %v273 = vstv %s272
    %v274 = vmul.f32 %v264, %v273
    %v275 = vmul.f32 %v265, %v273
    %v276 = vmul.f32 %v266, %v273
    %v277 = vmul.f32 %v267, %v273
    %v278 = vmul.f32 %v268, %v273
    %v279 = vmul.f32 %v269, %v273
    %v280 = vmul.f32 %v270, %v273
    %v281 = vadd.f32 %v208, %v274
    %v282 = vadd.f32 %v209, %v275
    %v283 = vadd.f32 %v210, %v276
    %v284 = vadd.f32 %v211, %v277
    %v285 = vadd.f32 %v212, %v278
    %v286 = vadd.f32 %v213, %v279
    %v287 = vadd.f32 %v214, %v280
    %s288 = sld [smem:[#allocation7 + $0x7]]
    %v289 = vstv %s288
    %v290 = vmul.f32 %v264, %v289
    %v291 = vmul.f32 %v265, %v289
    %v292 = vmul.f32 %v266, %v289
    %v293 = vmul.f32 %v267, %v289
    %v294 = vmul.f32 %v268, %v289
    %v295 = vmul.f32 %v269, %v289
    %v296 = vmul.f32 %v270, %v289
    %v297 = vadd.f32 %v224, %v290
    %v298 = vadd.f32 %v225, %v291
    %v299 = vadd.f32 %v226, %v292
    %v300 = vadd.f32 %v227, %v293
    %v301 = vadd.f32 %v228, %v294
    %v302 = vadd.f32 %v229, %v295
    %v303 = vadd.f32 %v230, %v296
    %s304 = sld [smem:[#allocation7 + $0xd]]
    %v305 = vstv %s304
    %v306 = vmul.f32 %v265, %v305
    %v307 = vmul.f32 %v266, %v305
    %v308 = vmul.f32 %v267, %v305
    %v309 = vmul.f32 %v268, %v305
    %v310 = vmul.f32 %v269, %v305
    %v311 = vmul.f32 %v270, %v305
    %v312 = vmul.f32 %v271, %v305
    %v313 = vadd.f32 %v240, %v306
    %v314 = vadd.f32 %v241, %v307
    %v315 = vadd.f32 %v242, %v308
    %v316 = vadd.f32 %v243, %v309
    %v317 = vadd.f32 %v244, %v310
    %v318 = vadd.f32 %v245, %v311
    %v319 = vadd.f32 %v246, %v312
    %s320 = sld [smem:[#allocation7 + $0xf]]
    %v321 = vstv %s320
    %v322 = vmul.f32 %v265, %v321
    %v323 = vmul.f32 %v266, %v321
    %v324 = vmul.f32 %v267, %v321
    %v325 = vmul.f32 %v268, %v321
    %v326 = vmul.f32 %v269, %v321
    %v327 = vmul.f32 %v270, %v321
    %v328 = vmul.f32 %v271, %v321
    %v329 = vadd.f32 %v256, %v322
    %v330 = vadd.f32 %v257, %v323
    %v331 = vadd.f32 %v258, %v324
    %v332 = vadd.f32 %v259, %v325
    %v333 = vadd.f32 %v260, %v326
    %v334 = vadd.f32 %v261, %v327
    %v335 = vadd.f32 %v262, %v328
    %s336 = scalar_lea.vmem [#allocation3], 256
    %v337 = vld [vmem:[%s336] sm:$0xff]
    %v338 = vld [vmem:[%s336 + $0x8] sm:$0xff]
    %v339 = vld [vmem:[%s336 + $0x10] sm:$0xff]
    %v340 = vld [vmem:[%s336 + $0x18] sm:$0xff]
    %v341 = vld [vmem:[%s336 + $0x20] sm:$0xff]
    %v342 = vld [vmem:[%s336 + $0x28] sm:$0xff]
    %v343 = vld [vmem:[%s336 + $0x30] sm:$0xff]
    %v344 = vld [vmem:[%s336 + $0x38] sm:$0xff]
    %s345 = sld [smem:[#allocation7 + $0x10]]
    %v346 = vstv %s345
    %v347 = vmul.f32 %v337, %v346
    %v348 = vmul.f32 %v338, %v346
    %v349 = vmul.f32 %v339, %v346
    %v350 = vmul.f32 %v340, %v346
    %v351 = vmul.f32 %v341, %v346
    %v352 = vmul.f32 %v342, %v346
    %v353 = vmul.f32 %v343, %v346
    %v354 = vadd.f32 %v281, %v347
    %v355 = vadd.f32 %v282, %v348
    %v356 = vadd.f32 %v283, %v349
    %v357 = vadd.f32 %v284, %v350
    %v358 = vadd.f32 %v285, %v351
    %v359 = vadd.f32 %v286, %v352
    %v360 = vadd.f32 %v287, %v353
    %s361 = sld [smem:[#allocation7 + $0x12]]
    %v362 = vstv %s361
    %v363 = vmul.f32 %v337, %v362
    %v364 = vmul.f32 %v338, %v362
    %v365 = vmul.f32 %v339, %v362
    %v366 = vmul.f32 %v340, %v362
    %v367 = vmul.f32 %v341, %v362
    %v368 = vmul.f32 %v342, %v362
    %v369 = vmul.f32 %v343, %v362
    %v370 = vadd.f32 %v297, %v363
    %v371 = vadd.f32 %v298, %v364
    %v372 = vadd.f32 %v299, %v365
    %v373 = vadd.f32 %v300, %v366
    %v374 = vadd.f32 %v301, %v367
    %v375 = vadd.f32 %v302, %v368
    %v376 = vadd.f32 %v303, %v369
    %s377 = sld [smem:[#allocation7 + $0x18]]
    %v378 = vstv %s377
    %v379 = vmul.f32 %v338, %v378
    %v380 = vmul.f32 %v339, %v378
    %v381 = vmul.f32 %v340, %v378
    %v382 = vmul.f32 %v341, %v378
    %v383 = vmul.f32 %v342, %v378
    %v384 = vmul.f32 %v343, %v378
    %v385 = vmul.f32 %v344, %v378
    %v386 = vadd.f32 %v313, %v379
    %v387 = vadd.f32 %v314, %v380
    %v388 = vadd.f32 %v315, %v381
    %v389 = vadd.f32 %v316, %v382
    %v390 = vadd.f32 %v317, %v383
    %v391 = vadd.f32 %v318, %v384
    %v392 = vadd.f32 %v319, %v385
    %s393 = sld [smem:[#allocation7 + $0x1a]]
    %v394 = vstv %s393
    %v395 = vmul.f32 %v338, %v394
    %v396 = vmul.f32 %v339, %v394
    %v397 = vmul.f32 %v340, %v394
    %v398 = vmul.f32 %v341, %v394
    %v399 = vmul.f32 %v342, %v394
    %v400 = vmul.f32 %v343, %v394
    %v401 = vmul.f32 %v344, %v394
    %v402 = vadd.f32 %v329, %v395
    %v403 = vadd.f32 %v330, %v396
    %v404 = vadd.f32 %v331, %v397
    %v405 = vadd.f32 %v332, %v398
    %v406 = vadd.f32 %v333, %v399
    %v407 = vadd.f32 %v334, %v400
    %v408 = vadd.f32 %v335, %v401
    %s409 = scalar_lea.vmem [#allocation3], 320
    %v410 = vld [vmem:[%s409] sm:$0xff]
    %v411 = vld [vmem:[%s409 + $0x8] sm:$0xff]
    %v412 = vld [vmem:[%s409 + $0x10] sm:$0xff]
    %v413 = vld [vmem:[%s409 + $0x18] sm:$0xff]
    %v414 = vld [vmem:[%s409 + $0x20] sm:$0xff]
    %v415 = vld [vmem:[%s409 + $0x28] sm:$0xff]
    %v416 = vld [vmem:[%s409 + $0x30] sm:$0xff]
    %v417 = vld [vmem:[%s409 + $0x38] sm:$0xff]
    %s418 = sld [smem:[#allocation7 + $0x11]]
    %v419 = vstv %s418
    %v420 = vmul.f32 %v410, %v419
    %v421 = vmul.f32 %v411, %v419
    %v422 = vmul.f32 %v412, %v419
    %v423 = vmul.f32 %v413, %v419
    %v424 = vmul.f32 %v414, %v419
    %v425 = vmul.f32 %v415, %v419
    %v426 = vmul.f32 %v416, %v419
    %v427 = vadd.f32 %v354, %v420
    %v428 = vadd.f32 %v355, %v421
    %v429 = vadd.f32 %v356, %v422
    %v430 = vadd.f32 %v357, %v423
    %v431 = vadd.f32 %v358, %v424
    %v432 = vadd.f32 %v359, %v425
    %v433 = vadd.f32 %v360, %v426
    %s434 = sld [smem:[#allocation7 + $0x13]]
    %v435 = vstv %s434
    %v436 = vmul.f32 %v410, %v435
    %v437 = vmul.f32 %v411, %v435
    %v438 = vmul.f32 %v412, %v435
    %v439 = vmul.f32 %v413, %v435
    %v440 = vmul.f32 %v414, %v435
    %v441 = vmul.f32 %v415, %v435
    %v442 = vmul.f32 %v416, %v435
    %v443 = vadd.f32 %v370, %v436
    %v444 = vadd.f32 %v371, %v437
    %v445 = vadd.f32 %v372, %v438
    %v446 = vadd.f32 %v373, %v439
    %v447 = vadd.f32 %v374, %v440
    %v448 = vadd.f32 %v375, %v441
    %v449 = vadd.f32 %v376, %v442
    %s450 = sld [smem:[#allocation7 + $0x19]]
    %v451 = vstv %s450
    %v452 = vmul.f32 %v411, %v451
    %v453 = vmul.f32 %v412, %v451
    %v454 = vmul.f32 %v413, %v451
    %v455 = vmul.f32 %v414, %v451
    %v456 = vmul.f32 %v415, %v451
    %v457 = vmul.f32 %v416, %v451
    %v458 = vmul.f32 %v417, %v451
    %v459 = vadd.f32 %v386, %v452
    %v460 = vadd.f32 %v387, %v453
    %v461 = vadd.f32 %v388, %v454
    %v462 = vadd.f32 %v389, %v455
    %v463 = vadd.f32 %v390, %v456
    %v464 = vadd.f32 %v391, %v457
    %v465 = vadd.f32 %v392, %v458
    %s466 = sld [smem:[#allocation7 + $0x1b]]
    %v467 = vstv %s466
    %v468 = vmul.f32 %v411, %v467
    %v469 = vmul.f32 %v412, %v467
    %v470 = vmul.f32 %v413, %v467
    %v471 = vmul.f32 %v414, %v467
    %v472 = vmul.f32 %v415, %v467
    %v473 = vmul.f32 %v416, %v467
    %v474 = vmul.f32 %v417, %v467
    %v475 = vadd.f32 %v402, %v468
    %v476 = vadd.f32 %v403, %v469
    %v477 = vadd.f32 %v404, %v470
    %v478 = vadd.f32 %v405, %v471
    %v479 = vadd.f32 %v406, %v472
    %v480 = vadd.f32 %v407, %v473
    %v481 = vadd.f32 %v408, %v474
    %s482 = scalar_lea.vmem [#allocation3], 384
    %v483 = vld [vmem:[%s482] sm:$0xff]
    %v484 = vld [vmem:[%s482 + $0x8] sm:$0xff]
    %v485 = vld [vmem:[%s482 + $0x10] sm:$0xff]
    %v486 = vld [vmem:[%s482 + $0x18] sm:$0xff]
    %v487 = vld [vmem:[%s482 + $0x20] sm:$0xff]
    %v488 = vld [vmem:[%s482 + $0x28] sm:$0xff]
    %v489 = vld [vmem:[%s482 + $0x30] sm:$0xff]
    %v490 = vld [vmem:[%s482 + $0x38] sm:$0xff]
    %s491 = sld [smem:[#allocation7 + $0x14]]
    %v492 = vstv %s491
    %v493 = vmul.f32 %v483, %v492
    %v494 = vmul.f32 %v484, %v492
    %v495 = vmul.f32 %v485, %v492
    %v496 = vmul.f32 %v486, %v492
    %v497 = vmul.f32 %v487, %v492
    %v498 = vmul.f32 %v488, %v492
    %v499 = vmul.f32 %v489, %v492
    %v500 = vadd.f32 %v427, %v493
    %v501 = vadd.f32 %v428, %v494
    %v502 = vadd.f32 %v429, %v495
    %v503 = vadd.f32 %v430, %v496
    %v504 = vadd.f32 %v431, %v497
    %v505 = vadd.f32 %v432, %v498
    %v506 = vadd.f32 %v433, %v499
    %s507 = sld [smem:[#allocation7 + $0x16]]
    %v508 = vstv %s507
    %v509 = vmul.f32 %v483, %v508
    %v510 = vmul.f32 %v484, %v508
    %v511 = vmul.f32 %v485, %v508
    %v512 = vmul.f32 %v486, %v508
    %v513 = vmul.f32 %v487, %v508
    %v514 = vmul.f32 %v488, %v508
    %v515 = vmul.f32 %v489, %v508
    %v516 = vadd.f32 %v443, %v509
    %v517 = vadd.f32 %v444, %v510
    %v518 = vadd.f32 %v445, %v511
    %v519 = vadd.f32 %v446, %v512
    %v520 = vadd.f32 %v447, %v513
    %v521 = vadd.f32 %v448, %v514
    %v522 = vadd.f32 %v449, %v515
    %s523 = sld [smem:[#allocation7 + $0x1c]]
    %v524 = vstv %s523
    %v525 = vmul.f32 %v484, %v524
    %v526 = vmul.f32 %v485, %v524
    %v527 = vmul.f32 %v486, %v524
    %v528 = vmul.f32 %v487, %v524
    %v529 = vmul.f32 %v488, %v524
    %v530 = vmul.f32 %v489, %v524
    %v531 = vmul.f32 %v490, %v524
    %v532 = vadd.f32 %v459, %v525
    %v533 = vadd.f32 %v460, %v526
    %v534 = vadd.f32 %v461, %v527
    %v535 = vadd.f32 %v462, %v528
    %v536 = vadd.f32 %v463, %v529
    %v537 = vadd.f32 %v464, %v530
    %v538 = vadd.f32 %v465, %v531
    %s539 = sld [smem:[#allocation7 + $0x1e]]
    %v540 = vstv %s539
    %v541 = vmul.f32 %v484, %v540
    %v542 = vmul.f32 %v485, %v540
    %v543 = vmul.f32 %v486, %v540
    %v544 = vmul.f32 %v487, %v540
    %v545 = vmul.f32 %v488, %v540
    %v546 = vmul.f32 %v489, %v540
    %v547 = vmul.f32 %v490, %v540
    %v548 = vadd.f32 %v475, %v541
    %v549 = vadd.f32 %v476, %v542
    %v550 = vadd.f32 %v477, %v543
    %v551 = vadd.f32 %v478, %v544
    %v552 = vadd.f32 %v479, %v545
    %v553 = vadd.f32 %v480, %v546
    %v554 = vadd.f32 %v481, %v547
    %s555 = scalar_lea.vmem [#allocation3], 448
    %v556 = vld [vmem:[%s555] sm:$0xff]
    %v557 = vld [vmem:[%s555 + $0x8] sm:$0xff]
    %v558 = vld [vmem:[%s555 + $0x10] sm:$0xff]
    %v559 = vld [vmem:[%s555 + $0x18] sm:$0xff]
    %v560 = vld [vmem:[%s555 + $0x20] sm:$0xff]
    %v561 = vld [vmem:[%s555 + $0x28] sm:$0xff]
    %v562 = vld [vmem:[%s555 + $0x30] sm:$0xff]
    %v563 = vld [vmem:[%s555 + $0x38] sm:$0xff]
    %s564 = sld [smem:[#allocation7 + $0x15]]
    %v565 = vstv %s564
    %v566 = vmul.f32 %v556, %v565
    %v567 = vmul.f32 %v557, %v565
    %v568 = vmul.f32 %v558, %v565
    %v569 = vmul.f32 %v559, %v565
    %v570 = vmul.f32 %v560, %v565
    %v571 = vmul.f32 %v561, %v565
    %v572 = vmul.f32 %v562, %v565
    %v573 = vadd.f32 %v500, %v566
    %v574 = vadd.f32 %v501, %v567
    %v575 = vadd.f32 %v502, %v568
    %v576 = vadd.f32 %v503, %v569
    %v577 = vadd.f32 %v504, %v570
    %v578 = vadd.f32 %v505, %v571
    %v579 = vadd.f32 %v506, %v572
    %s580 = sld [smem:[#allocation7 + $0x17]]
    %v581 = vstv %s580
    %v582 = vmul.f32 %v556, %v581
    %v583 = vmul.f32 %v557, %v581
    %v584 = vmul.f32 %v558, %v581
    %v585 = vmul.f32 %v559, %v581
    %v586 = vmul.f32 %v560, %v581
    %v587 = vmul.f32 %v561, %v581
    %v588 = vmul.f32 %v562, %v581
    %v589 = vadd.f32 %v516, %v582
    %v590 = vadd.f32 %v517, %v583
    %v591 = vadd.f32 %v518, %v584
    %v592 = vadd.f32 %v519, %v585
    %v593 = vadd.f32 %v520, %v586
    %v594 = vadd.f32 %v521, %v587
    %v595 = vadd.f32 %v522, %v588
    %s596 = sld [smem:[#allocation7 + $0x1d]]
    %v597 = vstv %s596
    %v598 = vmul.f32 %v557, %v597
    %v599 = vmul.f32 %v558, %v597
    %v600 = vmul.f32 %v559, %v597
    %v601 = vmul.f32 %v560, %v597
    %v602 = vmul.f32 %v561, %v597
    %v603 = vmul.f32 %v562, %v597
    %v604 = vmul.f32 %v563, %v597
    %v605 = vadd.f32 %v532, %v598
    %v606 = vadd.f32 %v533, %v599
    %v607 = vadd.f32 %v534, %v600
    %v608 = vadd.f32 %v535, %v601
    %v609 = vadd.f32 %v536, %v602
    %v610 = vadd.f32 %v537, %v603
    %v611 = vadd.f32 %v538, %v604
    %s612 = sld [smem:[#allocation7 + $0x1f]]
    %v613 = vstv %s612
    %v614 = vmul.f32 %v557, %v613
    %v615 = vmul.f32 %v558, %v613
    %v616 = vmul.f32 %v559, %v613
    %v617 = vmul.f32 %v560, %v613
    %v618 = vmul.f32 %v561, %v613
    %v619 = vmul.f32 %v562, %v613
    %v620 = vmul.f32 %v563, %v613
    %v621 = vadd.f32 %v548, %v614
    %v622 = vadd.f32 %v549, %v615
    %v623 = vadd.f32 %v550, %v616
    %v624 = vadd.f32 %v551, %v617
    %v625 = vadd.f32 %v552, %v618
    %v626 = vadd.f32 %v553, %v619
    %v627 = vadd.f32 %v554, %v620
    %s628 = scalar_lea.vmem [#allocation3], 512
    %v629 = vld [vmem:[%s628] sm:$0xff]
    %v630 = vld [vmem:[%s628 + $0x8] sm:$0xff]
    %v631 = vld [vmem:[%s628 + $0x10] sm:$0xff]
    %v632 = vld [vmem:[%s628 + $0x18] sm:$0xff]
    %v633 = vld [vmem:[%s628 + $0x20] sm:$0xff]
    %v634 = vld [vmem:[%s628 + $0x28] sm:$0xff]
    %v635 = vld [vmem:[%s628 + $0x30] sm:$0xff]
    %v636 = vld [vmem:[%s628 + $0x38] sm:$0xff]
    %s637 = sld [smem:[#allocation7 + $0x20]]
    %v638 = vstv %s637
    %v639 = vmul.f32 %v629, %v638
    %v640 = vmul.f32 %v630, %v638
    %v641 = vmul.f32 %v631, %v638
    %v642 = vmul.f32 %v632, %v638
    %v643 = vmul.f32 %v633, %v638
    %v644 = vmul.f32 %v634, %v638
    %v645 = vmul.f32 %v635, %v638
    %v646 = vadd.f32 %v573, %v639
    %v647 = vadd.f32 %v574, %v640
    %v648 = vadd.f32 %v575, %v641
    %v649 = vadd.f32 %v576, %v642
    %v650 = vadd.f32 %v577, %v643
    %v651 = vadd.f32 %v578, %v644
    %v652 = vadd.f32 %v579, %v645
    %s653 = sld [smem:[#allocation7 + $0x22]]
    %v654 = vstv %s653
    %v655 = vmul.f32 %v629, %v654
    %v656 = vmul.f32 %v630, %v654
    %v657 = vmul.f32 %v631, %v654
    %v658 = vmul.f32 %v632, %v654
    %v659 = vmul.f32 %v633, %v654
    %v660 = vmul.f32 %v634, %v654
    %v661 = vmul.f32 %v635, %v654
    %v662 = vadd.f32 %v589, %v655
    %v663 = vadd.f32 %v590, %v656
    %v664 = vadd.f32 %v591, %v657
    %v665 = vadd.f32 %v592, %v658
    %v666 = vadd.f32 %v593, %v659
    %v667 = vadd.f32 %v594, %v660
    %v668 = vadd.f32 %v595, %v661
    %s669 = sld [smem:[#allocation7 + $0x28]]
    %v670 = vstv %s669
    %v671 = vmul.f32 %v630, %v670
    %v672 = vmul.f32 %v631, %v670
    %v673 = vmul.f32 %v632, %v670
    %v674 = vmul.f32 %v633, %v670
    %v675 = vmul.f32 %v634, %v670
    %v676 = vmul.f32 %v635, %v670
    %v677 = vmul.f32 %v636, %v670
    %v678 = vadd.f32 %v605, %v671
    %v679 = vadd.f32 %v606, %v672
    %v680 = vadd.f32 %v607, %v673
    %v681 = vadd.f32 %v608, %v674
    %v682 = vadd.f32 %v609, %v675
    %v683 = vadd.f32 %v610, %v676
    %v684 = vadd.f32 %v611, %v677
    %s685 = sld [smem:[#allocation7 + $0x2a]]
    %v686 = vstv %s685
    %v687 = vmul.f32 %v630, %v686
    %v688 = vmul.f32 %v631, %v686
    %v689 = vmul.f32 %v632, %v686
    %v690 = vmul.f32 %v633, %v686
    %v691 = vmul.f32 %v634, %v686
    %v692 = vmul.f32 %v635, %v686
    %v693 = vmul.f32 %v636, %v686
    %v694 = vadd.f32 %v621, %v687
    %v695 = vadd.f32 %v622, %v688
    %v696 = vadd.f32 %v623, %v689
    %v697 = vadd.f32 %v624, %v690
    %v698 = vadd.f32 %v625, %v691
    %v699 = vadd.f32 %v626, %v692
    %v700 = vadd.f32 %v627, %v693
    %s701 = scalar_lea.vmem [#allocation3], 576
    %v702 = vld [vmem:[%s701] sm:$0xff]
    %v703 = vld [vmem:[%s701 + $0x8] sm:$0xff]
    %v704 = vld [vmem:[%s701 + $0x10] sm:$0xff]
    %v705 = vld [vmem:[%s701 + $0x18] sm:$0xff]
    %v706 = vld [vmem:[%s701 + $0x20] sm:$0xff]
    %v707 = vld [vmem:[%s701 + $0x28] sm:$0xff]
    %v708 = vld [vmem:[%s701 + $0x30] sm:$0xff]
    %v709 = vld [vmem:[%s701 + $0x38] sm:$0xff]
    %s710 = sld [smem:[#allocation7 + $0x21]]
    %v711 = vstv %s710
    %v712 = vmul.f32 %v702, %v711
    %v713 = vmul.f32 %v703, %v711
    %v714 = vmul.f32 %v704, %v711
    %v715 = vmul.f32 %v705, %v711
    %v716 = vmul.f32 %v706, %v711
    %v717 = vmul.f32 %v707, %v711
    %v718 = vmul.f32 %v708, %v711
    %v719 = vadd.f32 %v646, %v712
    %v720 = vadd.f32 %v647, %v713
    %v721 = vadd.f32 %v648, %v714
    %v722 = vadd.f32 %v649, %v715
    %v723 = vadd.f32 %v650, %v716
    %v724 = vadd.f32 %v651, %v717
    %v725 = vadd.f32 %v652, %v718
    %s726 = sld [smem:[#allocation7 + $0x23]]
    %v727 = vstv %s726
    %v728 = vmul.f32 %v702, %v727
    %v729 = vmul.f32 %v703, %v727
    %v730 = vmul.f32 %v704, %v727
    %v731 = vmul.f32 %v705, %v727
    %v732 = vmul.f32 %v706, %v727
    %v733 = vmul.f32 %v707, %v727
    %v734 = vmul.f32 %v708, %v727
    %v735 = vadd.f32 %v662, %v728
    %v736 = vadd.f32 %v663, %v729
    %v737 = vadd.f32 %v664, %v730
    %v738 = vadd.f32 %v665, %v731
    %v739 = vadd.f32 %v666, %v732
    %v740 = vadd.f32 %v667, %v733
    %v741 = vadd.f32 %v668, %v734
    %s742 = sld [smem:[#allocation7 + $0x29]]
    %v743 = vstv %s742
    %v744 = vmul.f32 %v703, %v743
    %v745 = vmul.f32 %v704, %v743
    %v746 = vmul.f32 %v705, %v743
    %v747 = vmul.f32 %v706, %v743
    %v748 = vmul.f32 %v707, %v743
    %v749 = vmul.f32 %v708, %v743
    %v750 = vmul.f32 %v709, %v743
    %v751 = vadd.f32 %v678, %v744
    %v752 = vadd.f32 %v679, %v745
    %v753 = vadd.f32 %v680, %v746
    %v754 = vadd.f32 %v681, %v747
    %v755 = vadd.f32 %v682, %v748
    %v756 = vadd.f32 %v683, %v749
    %v757 = vadd.f32 %v684, %v750
    %s758 = sld [smem:[#allocation7 + $0x2b]]
    %v759 = vstv %s758
    %v760 = vmul.f32 %v703, %v759
    %v761 = vmul.f32 %v704, %v759
    %v762 = vmul.f32 %v705, %v759
    %v763 = vmul.f32 %v706, %v759
    %v764 = vmul.f32 %v707, %v759
    %v765 = vmul.f32 %v708, %v759
    %v766 = vmul.f32 %v709, %v759
    %v767 = vadd.f32 %v694, %v760
    %v768 = vadd.f32 %v695, %v761
    %v769 = vadd.f32 %v696, %v762
    %v770 = vadd.f32 %v697, %v763
    %v771 = vadd.f32 %v698, %v764
    %v772 = vadd.f32 %v699, %v765
    %v773 = vadd.f32 %v700, %v766
    %s774 = scalar_lea.vmem [#allocation3], 640
    %v775 = vld [vmem:[%s774] sm:$0xff]
    %v776 = vld [vmem:[%s774 + $0x8] sm:$0xff]
    %v777 = vld [vmem:[%s774 + $0x10] sm:$0xff]
    %v778 = vld [vmem:[%s774 + $0x18] sm:$0xff]
    %v779 = vld [vmem:[%s774 + $0x20] sm:$0xff]
    %v780 = vld [vmem:[%s774 + $0x28] sm:$0xff]
    %v781 = vld [vmem:[%s774 + $0x30] sm:$0xff]
    %v782 = vld [vmem:[%s774 + $0x38] sm:$0xff]
    %s783 = sld [smem:[#allocation7 + $0x24]]
    %v784 = vstv %s783
    %v785 = vmul.f32 %v775, %v784
    %v786 = vmul.f32 %v776, %v784
    %v787 = vmul.f32 %v777, %v784
    %v788 = vmul.f32 %v778, %v784
    %v789 = vmul.f32 %v779, %v784
    %v790 = vmul.f32 %v780, %v784
    %v791 = vmul.f32 %v781, %v784
    %v792 = vadd.f32 %v719, %v785
    %v793 = vadd.f32 %v720, %v786
    %v794 = vadd.f32 %v721, %v787
    %v795 = vadd.f32 %v722, %v788
    %v796 = vadd.f32 %v723, %v789
    %v797 = vadd.f32 %v724, %v790
    %v798 = vadd.f32 %v725, %v791
    %s799 = sld [smem:[#allocation7 + $0x26]]
    %v800 = vstv %s799
    %v801 = vmul.f32 %v775, %v800
    %v802 = vmul.f32 %v776, %v800
    %v803 = vmul.f32 %v777, %v800
    %v804 = vmul.f32 %v778, %v800
    %v805 = vmul.f32 %v779, %v800
    %v806 = vmul.f32 %v780, %v800
    %v807 = vmul.f32 %v781, %v800
    %v808 = vadd.f32 %v735, %v801
    %v809 = vadd.f32 %v736, %v802
    %v810 = vadd.f32 %v737, %v803
    %v811 = vadd.f32 %v738, %v804
    %v812 = vadd.f32 %v739, %v805
    %v813 = vadd.f32 %v740, %v806
    %v814 = vadd.f32 %v741, %v807
    %s815 = sld [smem:[#allocation7 + $0x2c]]
    %v816 = vstv %s815
    %v817 = vmul.f32 %v776, %v816
    %v818 = vmul.f32 %v777, %v816
    %v819 = vmul.f32 %v778, %v816
    %v820 = vmul.f32 %v779, %v816
    %v821 = vmul.f32 %v780, %v816
    %v822 = vmul.f32 %v781, %v816
    %v823 = vmul.f32 %v782, %v816
    %v824 = vadd.f32 %v751, %v817
    %v825 = vadd.f32 %v752, %v818
    %v826 = vadd.f32 %v753, %v819
    %v827 = vadd.f32 %v754, %v820
    %v828 = vadd.f32 %v755, %v821
    %v829 = vadd.f32 %v756, %v822
    %v830 = vadd.f32 %v757, %v823
    %s831 = sld [smem:[#allocation7 + $0x2e]]
    %v832 = vstv %s831
    %v833 = vmul.f32 %v776, %v832
    %v834 = vmul.f32 %v777, %v832
    %v835 = vmul.f32 %v778, %v832
    %v836 = vmul.f32 %v779, %v832
    %v837 = vmul.f32 %v780, %v832
    %v838 = vmul.f32 %v781, %v832
    %v839 = vmul.f32 %v782, %v832
    %v840 = vadd.f32 %v767, %v833
    %v841 = vadd.f32 %v768, %v834
    %v842 = vadd.f32 %v769, %v835
    %v843 = vadd.f32 %v770, %v836
    %v844 = vadd.f32 %v771, %v837
    %v845 = vadd.f32 %v772, %v838
    %v846 = vadd.f32 %v773, %v839
    %s847 = scalar_lea.vmem [#allocation3], 704
    %v848 = vld [vmem:[%s847] sm:$0xff]
    %v849 = vld [vmem:[%s847 + $0x8] sm:$0xff]
    %v850 = vld [vmem:[%s847 + $0x10] sm:$0xff]
    %v851 = vld [vmem:[%s847 + $0x18] sm:$0xff]
    %v852 = vld [vmem:[%s847 + $0x20] sm:$0xff]
    %v853 = vld [vmem:[%s847 + $0x28] sm:$0xff]
    %v854 = vld [vmem:[%s847 + $0x30] sm:$0xff]
    %v855 = vld [vmem:[%s847 + $0x38] sm:$0xff]
    %s856 = sld [smem:[#allocation7 + $0x25]]
    %v857 = vstv %s856
    %v858 = vmul.f32 %v848, %v857
    %v859 = vmul.f32 %v849, %v857
    %v860 = vmul.f32 %v850, %v857
    %v861 = vmul.f32 %v851, %v857
    %v862 = vmul.f32 %v852, %v857
    %v863 = vmul.f32 %v853, %v857
    %v864 = vmul.f32 %v854, %v857
    %v865 = vadd.f32 %v792, %v858
    %v866 = vadd.f32 %v793, %v859
    %v867 = vadd.f32 %v794, %v860
    %v868 = vadd.f32 %v795, %v861
    %v869 = vadd.f32 %v796, %v862
    %v870 = vadd.f32 %v797, %v863
    %v871 = vadd.f32 %v798, %v864
    %s872 = sld [smem:[#allocation7 + $0x27]]
    %v873 = vstv %s872
    %v874 = vmul.f32 %v848, %v873
    %v875 = vmul.f32 %v849, %v873
    %v876 = vmul.f32 %v850, %v873
    %v877 = vmul.f32 %v851, %v873
    %v878 = vmul.f32 %v852, %v873
    %v879 = vmul.f32 %v853, %v873
    %v880 = vmul.f32 %v854, %v873
    %v881 = vadd.f32 %v808, %v874
    %v882 = vadd.f32 %v809, %v875
    %v883 = vadd.f32 %v810, %v876
    %v884 = vadd.f32 %v811, %v877
    %v885 = vadd.f32 %v812, %v878
    %v886 = vadd.f32 %v813, %v879
    %v887 = vadd.f32 %v814, %v880
    %s888 = sld [smem:[#allocation7 + $0x2d]]
    %v889 = vstv %s888
    %v890 = vmul.f32 %v849, %v889
    %v891 = vmul.f32 %v850, %v889
    %v892 = vmul.f32 %v851, %v889
    %v893 = vmul.f32 %v852, %v889
    %v894 = vmul.f32 %v853, %v889
    %v895 = vmul.f32 %v854, %v889
    %v896 = vmul.f32 %v855, %v889
    %v897 = vadd.f32 %v824, %v890
    %v898 = vadd.f32 %v825, %v891
    %v899 = vadd.f32 %v826, %v892
    %v900 = vadd.f32 %v827, %v893
    %v901 = vadd.f32 %v828, %v894
    %v902 = vadd.f32 %v829, %v895
    %v903 = vadd.f32 %v830, %v896
    %s904 = sld [smem:[#allocation7 + $0x2f]]
    %v905 = vstv %s904
    %v906 = vmul.f32 %v849, %v905
    %v907 = vmul.f32 %v850, %v905
    %v908 = vmul.f32 %v851, %v905
    %v909 = vmul.f32 %v852, %v905
    %v910 = vmul.f32 %v853, %v905
    %v911 = vmul.f32 %v854, %v905
    %v912 = vmul.f32 %v855, %v905
    %v913 = vadd.f32 %v840, %v906
    %v914 = vadd.f32 %v841, %v907
    %v915 = vadd.f32 %v842, %v908
    %v916 = vadd.f32 %v843, %v909
    %v917 = vadd.f32 %v844, %v910
    %v918 = vadd.f32 %v845, %v911
    %v919 = vadd.f32 %v846, %v912
    %s920 = scalar_lea.vmem [#allocation3], 768
    %v921 = vld [vmem:[%s920] sm:$0xff]
    %v922 = vld [vmem:[%s920 + $0x8] sm:$0xff]
    %v923 = vld [vmem:[%s920 + $0x10] sm:$0xff]
    %v924 = vld [vmem:[%s920 + $0x18] sm:$0xff]
    %v925 = vld [vmem:[%s920 + $0x20] sm:$0xff]
    %v926 = vld [vmem:[%s920 + $0x28] sm:$0xff]
    %v927 = vld [vmem:[%s920 + $0x30] sm:$0xff]
    %v928 = vld [vmem:[%s920 + $0x38] sm:$0xff]
    %s929 = sld [smem:[#allocation7 + $0x30]]
    %v930 = vstv %s929
    %v931 = vmul.f32 %v921, %v930
    %v932 = vmul.f32 %v922, %v930
    %v933 = vmul.f32 %v923, %v930
    %v934 = vmul.f32 %v924, %v930
    %v935 = vmul.f32 %v925, %v930
    %v936 = vmul.f32 %v926, %v930
    %v937 = vmul.f32 %v927, %v930
    %v938 = vadd.f32 %v865, %v931
    %v939 = vadd.f32 %v866, %v932
    %v940 = vadd.f32 %v867, %v933
    %v941 = vadd.f32 %v868, %v934
    %v942 = vadd.f32 %v869, %v935
    %v943 = vadd.f32 %v870, %v936
    %v944 = vadd.f32 %v871, %v937
    %s945 = sld [smem:[#allocation7 + $0x32]]
    %v946 = vstv %s945
    %v947 = vmul.f32 %v921, %v946
    %v948 = vmul.f32 %v922, %v946
    %v949 = vmul.f32 %v923, %v946
    %v950 = vmul.f32 %v924, %v946
    %v951 = vmul.f32 %v925, %v946
    %v952 = vmul.f32 %v926, %v946
    %v953 = vmul.f32 %v927, %v946
    %v954 = vadd.f32 %v881, %v947
    %v955 = vadd.f32 %v882, %v948
    %v956 = vadd.f32 %v883, %v949
    %v957 = vadd.f32 %v884, %v950
    %v958 = vadd.f32 %v885, %v951
    %v959 = vadd.f32 %v886, %v952
    %v960 = vadd.f32 %v887, %v953
    %s961 = sld [smem:[#allocation7 + $0x38]]
    %v962 = vstv %s961
    %v963 = vmul.f32 %v922, %v962
    %v964 = vmul.f32 %v923, %v962
    %v965 = vmul.f32 %v924, %v962
    %v966 = vmul.f32 %v925, %v962
    %v967 = vmul.f32 %v926, %v962
    %v968 = vmul.f32 %v927, %v962
    %v969 = vmul.f32 %v928, %v962
    %v970 = vadd.f32 %v897, %v963
    %v971 = vadd.f32 %v898, %v964
    %v972 = vadd.f32 %v899, %v965
    %v973 = vadd.f32 %v900, %v966
    %v974 = vadd.f32 %v901, %v967
    %v975 = vadd.f32 %v902, %v968
    %v976 = vadd.f32 %v903, %v969
    %s977 = sld [smem:[#allocation7 + $0x3a]]
    %v978 = vstv %s977
    %v979 = vmul.f32 %v922, %v978
    %v980 = vmul.f32 %v923, %v978
    %v981 = vmul.f32 %v924, %v978
    %v982 = vmul.f32 %v925, %v978
    %v983 = vmul.f32 %v926, %v978
    %v984 = vmul.f32 %v927, %v978
    %v985 = vmul.f32 %v928, %v978
    %v986 = vadd.f32 %v913, %v979
    %v987 = vadd.f32 %v914, %v980
    %v988 = vadd.f32 %v915, %v981
    %v989 = vadd.f32 %v916, %v982
    %v990 = vadd.f32 %v917, %v983
    %v991 = vadd.f32 %v918, %v984
    %v992 = vadd.f32 %v919, %v985
    %s993 = scalar_lea.vmem [#allocation3], 832
    %v994 = vld [vmem:[%s993] sm:$0xff]
    %v995 = vld [vmem:[%s993 + $0x8] sm:$0xff]
    %v996 = vld [vmem:[%s993 + $0x10] sm:$0xff]
    %v997 = vld [vmem:[%s993 + $0x18] sm:$0xff]
    %v998 = vld [vmem:[%s993 + $0x20] sm:$0xff]
    %v999 = vld [vmem:[%s993 + $0x28] sm:$0xff]
    %v1000 = vld [vmem:[%s993 + $0x30] sm:$0xff]
    %v1001 = vld [vmem:[%s993 + $0x38] sm:$0xff]
    %s1002 = sld [smem:[#allocation7 + $0x31]]
    %v1003 = vstv %s1002
    %v1004 = vmul.f32 %v994, %v1003
    %v1005 = vmul.f32 %v995, %v1003
    %v1006 = vmul.f32 %v996, %v1003
    %v1007 = vmul.f32 %v997, %v1003
    %v1008 = vmul.f32 %v998, %v1003
    %v1009 = vmul.f32 %v999, %v1003
    %v1010 = vmul.f32 %v1000, %v1003
    %v1011 = vadd.f32 %v938, %v1004
    %v1012 = vadd.f32 %v939, %v1005
    %v1013 = vadd.f32 %v940, %v1006
    %v1014 = vadd.f32 %v941, %v1007
    %v1015 = vadd.f32 %v942, %v1008
    %v1016 = vadd.f32 %v943, %v1009
    %v1017 = vadd.f32 %v944, %v1010
    %s1018 = sld [smem:[#allocation7 + $0x33]]
    %v1019 = vstv %s1018
    %v1020 = vmul.f32 %v994, %v1019
    %v1021 = vmul.f32 %v995, %v1019
    %v1022 = vmul.f32 %v996, %v1019
    %v1023 = vmul.f32 %v997, %v1019
    %v1024 = vmul.f32 %v998, %v1019
    %v1025 = vmul.f32 %v999, %v1019
    %v1026 = vmul.f32 %v1000, %v1019
    %v1027 = vadd.f32 %v954, %v1020
    %v1028 = vadd.f32 %v955, %v1021
    %v1029 = vadd.f32 %v956, %v1022
    %v1030 = vadd.f32 %v957, %v1023
    %v1031 = vadd.f32 %v958, %v1024
    %v1032 = vadd.f32 %v959, %v1025
    %v1033 = vadd.f32 %v960, %v1026
    %s1034 = sld [smem:[#allocation7 + $0x39]]
    %v1035 = vstv %s1034
    %v1036 = vmul.f32 %v995, %v1035
    %v1037 = vmul.f32 %v996, %v1035
    %v1038 = vmul.f32 %v997, %v1035
    %v1039 = vmul.f32 %v998, %v1035
    %v1040 = vmul.f32 %v999, %v1035
    %v1041 = vmul.f32 %v1000, %v1035
    %v1042 = vmul.f32 %v1001, %v1035
    %v1043 = vadd.f32 %v970, %v1036
    %v1044 = vadd.f32 %v971, %v1037
    %v1045 = vadd.f32 %v972, %v1038
    %v1046 = vadd.f32 %v973, %v1039
    %v1047 = vadd.f32 %v974, %v1040
    %v1048 = vadd.f32 %v975, %v1041
    %v1049 = vadd.f32 %v976, %v1042
    %s1050 = sld [smem:[#allocation7 + $0x3b]]
    %v1051 = vstv %s1050
    %v1052 = vmul.f32 %v995, %v1051
    %v1053 = vmul.f32 %v996, %v1051
    %v1054 = vmul.f32 %v997, %v1051
    %v1055 = vmul.f32 %v998, %v1051
    %v1056 = vmul.f32 %v999, %v1051
    %v1057 = vmul.f32 %v1000, %v1051
    %v1058 = vmul.f32 %v1001, %v1051
    %v1059 = vadd.f32 %v986, %v1052
    %v1060 = vadd.f32 %v987, %v1053
    %v1061 = vadd.f32 %v988, %v1054
    %v1062 = vadd.f32 %v989, %v1055
    %v1063 = vadd.f32 %v990, %v1056
    %v1064 = vadd.f32 %v991, %v1057
    %v1065 = vadd.f32 %v992, %v1058
    %s1066 = scalar_lea.vmem [#allocation3], 896
    %v1067 = vld [vmem:[%s1066] sm:$0xff]
    %v1068 = vld [vmem:[%s1066 + $0x8] sm:$0xff]
    %v1069 = vld [vmem:[%s1066 + $0x10] sm:$0xff]
    %v1070 = vld [vmem:[%s1066 + $0x18] sm:$0xff]
    %v1071 = vld [vmem:[%s1066 + $0x20] sm:$0xff]
    %v1072 = vld [vmem:[%s1066 + $0x28] sm:$0xff]
    %v1073 = vld [vmem:[%s1066 + $0x30] sm:$0xff]
    %v1074 = vld [vmem:[%s1066 + $0x38] sm:$0xff]
    %s1075 = sld [smem:[#allocation7 + $0x34]]
    %v1076 = vstv %s1075
    %v1077 = vmul.f32 %v1067, %v1076
    %v1078 = vmul.f32 %v1068, %v1076
    %v1079 = vmul.f32 %v1069, %v1076
    %v1080 = vmul.f32 %v1070, %v1076
    %v1081 = vmul.f32 %v1071, %v1076
    %v1082 = vmul.f32 %v1072, %v1076
    %v1083 = vmul.f32 %v1073, %v1076
    %v1084 = vadd.f32 %v1011, %v1077
    %v1085 = vadd.f32 %v1012, %v1078
    %v1086 = vadd.f32 %v1013, %v1079
    %v1087 = vadd.f32 %v1014, %v1080
    %v1088 = vadd.f32 %v1015, %v1081
    %v1089 = vadd.f32 %v1016, %v1082
    %v1090 = vadd.f32 %v1017, %v1083
    %s1091 = sld [smem:[#allocation7 + $0x36]]
    %v1092 = vstv %s1091
    %v1093 = vmul.f32 %v1067, %v1092
    %v1094 = vmul.f32 %v1068, %v1092
    %v1095 = vmul.f32 %v1069, %v1092
    %v1096 = vmul.f32 %v1070, %v1092
    %v1097 = vmul.f32 %v1071, %v1092
    %v1098 = vmul.f32 %v1072, %v1092
    %v1099 = vmul.f32 %v1073, %v1092
    %v1100 = vadd.f32 %v1027, %v1093
    %v1101 = vadd.f32 %v1028, %v1094
    %v1102 = vadd.f32 %v1029, %v1095
    %v1103 = vadd.f32 %v1030, %v1096
    %v1104 = vadd.f32 %v1031, %v1097
    %v1105 = vadd.f32 %v1032, %v1098
    %v1106 = vadd.f32 %v1033, %v1099
    %s1107 = sld [smem:[#allocation7 + $0x3c]]
    %v1108 = vstv %s1107
    %v1109 = vmul.f32 %v1068, %v1108
    %v1110 = vmul.f32 %v1069, %v1108
    %v1111 = vmul.f32 %v1070, %v1108
    %v1112 = vmul.f32 %v1071, %v1108
    %v1113 = vmul.f32 %v1072, %v1108
    %v1114 = vmul.f32 %v1073, %v1108
    %v1115 = vmul.f32 %v1074, %v1108
    %v1116 = vadd.f32 %v1043, %v1109
    %v1117 = vadd.f32 %v1044, %v1110
    %v1118 = vadd.f32 %v1045, %v1111
    %v1119 = vadd.f32 %v1046, %v1112
    %v1120 = vadd.f32 %v1047, %v1113
    %v1121 = vadd.f32 %v1048, %v1114
    %v1122 = vadd.f32 %v1049, %v1115
    %s1123 = sld [smem:[#allocation7 + $0x3e]]
    %v1124 = vstv %s1123
    %v1125 = vmul.f32 %v1068, %v1124
    %v1126 = vmul.f32 %v1069, %v1124
    %v1127 = vmul.f32 %v1070, %v1124
    %v1128 = vmul.f32 %v1071, %v1124
    %v1129 = vmul.f32 %v1072, %v1124
    %v1130 = vmul.f32 %v1073, %v1124
    %v1131 = vmul.f32 %v1074, %v1124
    %v1132 = vadd.f32 %v1059, %v1125
    %v1133 = vadd.f32 %v1060, %v1126
    %v1134 = vadd.f32 %v1061, %v1127
    %v1135 = vadd.f32 %v1062, %v1128
    %v1136 = vadd.f32 %v1063, %v1129
    %v1137 = vadd.f32 %v1064, %v1130
    %v1138 = vadd.f32 %v1065, %v1131
    %s1139 = scalar_lea.vmem [#allocation3], 960
    %v1140 = vld [vmem:[%s1139] sm:$0xff]
    %v1141 = vld [vmem:[%s1139 + $0x8] sm:$0xff]
    %v1142 = vld [vmem:[%s1139 + $0x10] sm:$0xff]
    %v1143 = vld [vmem:[%s1139 + $0x18] sm:$0xff]
    %v1144 = vld [vmem:[%s1139 + $0x20] sm:$0xff]
    %v1145 = vld [vmem:[%s1139 + $0x28] sm:$0xff]
    %v1146 = vld [vmem:[%s1139 + $0x30] sm:$0xff]
    %v1147 = vld [vmem:[%s1139 + $0x38] sm:$0xff]
    %s1148 = sld [smem:[#allocation7 + $0x35]]
    %v1149 = vstv %s1148
    %v1150 = vmul.f32 %v1140, %v1149
    %v1151 = vmul.f32 %v1141, %v1149
    %v1152 = vmul.f32 %v1142, %v1149
    %v1153 = vmul.f32 %v1143, %v1149
    %v1154 = vmul.f32 %v1144, %v1149
    %v1155 = vmul.f32 %v1145, %v1149
    %v1156 = vmul.f32 %v1146, %v1149
    %v1157 = vadd.f32 %v1084, %v1150
    %v1158 = vadd.f32 %v1085, %v1151
    %v1159 = vadd.f32 %v1086, %v1152
    %v1160 = vadd.f32 %v1087, %v1153
    %v1161 = vadd.f32 %v1088, %v1154
    %v1162 = vadd.f32 %v1089, %v1155
    %v1163 = vadd.f32 %v1090, %v1156
    %s1164 = sld [smem:[#allocation7 + $0x37]]
    %v1165 = vstv %s1164
    %v1166 = vmul.f32 %v1140, %v1165
    %v1167 = vmul.f32 %v1141, %v1165
    %v1168 = vmul.f32 %v1142, %v1165
    %v1169 = vmul.f32 %v1143, %v1165
    %v1170 = vmul.f32 %v1144, %v1165
    %v1171 = vmul.f32 %v1145, %v1165
    %v1172 = vmul.f32 %v1146, %v1165
    %v1173 = vadd.f32 %v1100, %v1166
    %v1174 = vadd.f32 %v1101, %v1167
    %v1175 = vadd.f32 %v1102, %v1168
    %v1176 = vadd.f32 %v1103, %v1169
    %v1177 = vadd.f32 %v1104, %v1170
    %v1178 = vadd.f32 %v1105, %v1171
    %v1179 = vadd.f32 %v1106, %v1172
    %s1180 = sld [smem:[#allocation7 + $0x3d]]
    %v1181 = vstv %s1180
    %v1182 = vmul.f32 %v1141, %v1181
    %v1183 = vmul.f32 %v1142, %v1181
    %v1184 = vmul.f32 %v1143, %v1181
    %v1185 = vmul.f32 %v1144, %v1181
    %v1186 = vmul.f32 %v1145, %v1181
    %v1187 = vmul.f32 %v1146, %v1181
    %v1188 = vmul.f32 %v1147, %v1181
    %v1189 = vadd.f32 %v1116, %v1182
    %v1190 = vadd.f32 %v1117, %v1183
    %v1191 = vadd.f32 %v1118, %v1184
    %v1192 = vadd.f32 %v1119, %v1185
    %v1193 = vadd.f32 %v1120, %v1186
    %v1194 = vadd.f32 %v1121, %v1187
    %v1195 = vadd.f32 %v1122, %v1188
    %s1196 = sld [smem:[#allocation7 + $0x3f]]
    %v1197 = vstv %s1196
    %v1198 = vmul.f32 %v1141, %v1197
    %v1199 = vmul.f32 %v1142, %v1197
    %v1200 = vmul.f32 %v1143, %v1197
    %v1201 = vmul.f32 %v1144, %v1197
    %v1202 = vmul.f32 %v1145, %v1197
    %v1203 = vmul.f32 %v1146, %v1197
    %v1204 = vmul.f32 %v1147, %v1197
    %v1205 = vadd.f32 %v1132, %v1198
    %v1206 = vadd.f32 %v1133, %v1199
    %v1207 = vadd.f32 %v1134, %v1200
    %v1208 = vadd.f32 %v1135, %v1201
    %v1209 = vadd.f32 %v1136, %v1202
    %v1210 = vadd.f32 %v1137, %v1203
    %v1211 = vadd.f32 %v1138, %v1204
    %v1219 = vrot.slane %v1173, 1
    %v1220 = vrot.slane %v1174, 1
    %v1221 = vrot.slane %v1175, 1
    %v1222 = vrot.slane %v1176, 1
    %v1223 = vrot.slane %v1177, 1
    %v1224 = vrot.slane %v1178, 1
    %v1225 = vrot.slane %v1179, 1
    %v1233 = vadd.f32 %v1157, %v1219
    %v1234 = vadd.f32 %v1158, %v1220
    %v1235 = vadd.f32 %v1159, %v1221
    %v1236 = vadd.f32 %v1160, %v1222
    %v1237 = vadd.f32 %v1161, %v1223
    %v1238 = vadd.f32 %v1162, %v1224
    %v1239 = vadd.f32 %v1163, %v1225
    %v1240 = vadd.f32 %v1233, %v1189
    %v1241 = vadd.f32 %v1234, %v1190
    %v1242 = vadd.f32 %v1235, %v1191
    %v1243 = vadd.f32 %v1236, %v1192
    %v1244 = vadd.f32 %v1237, %v1193
    %v1245 = vadd.f32 %v1238, %v1194
    %v1246 = vadd.f32 %v1239, %v1195
    %v1254 = vrot.slane %v1205, 1
    %v1255 = vrot.slane %v1206, 1
    %v1256 = vrot.slane %v1207, 1
    %v1257 = vrot.slane %v1208, 1
    %v1258 = vrot.slane %v1209, 1
    %v1259 = vrot.slane %v1210, 1
    %v1260 = vrot.slane %v1211, 1
    %v1268 = vadd.f32 %v1240, %v1254
    %v1269 = vadd.f32 %v1241, %v1255
    %v1270 = vadd.f32 %v1242, %v1256
    %v1271 = vadd.f32 %v1243, %v1257
    %v1272 = vadd.f32 %v1244, %v1258
    %v1273 = vadd.f32 %v1245, %v1259
    %v1274 = vadd.f32 %v1246, %v1260
    %v1275 = vxor.u32 %v1268, 2147483648
    %v1276 = vxor.u32 %v1269, 2147483648
    %v1277 = vxor.u32 %v1270, 2147483648
    %v1278 = vxor.u32 %v1271, 2147483648
    %v1279 = vxor.u32 %v1272, 2147483648
    %v1280 = vxor.u32 %v1273, 2147483648
    %v1281 = vxor.u32 %v1274, 2147483648
    %v1282 = vmul.f32 %v1275, 1.442695
    %v1283 = vpow.pop %v1282
    %v1284 = vmul.f32 %v1276, 1.442695
    %v1285 = vpow.pop %v1284
    %v1286 = vmul.f32 %v1277, 1.442695
    %v1287 = vpow.pop %v1286
    %v1288 = vmul.f32 %v1278, 1.442695
    %v1289 = vpow.pop %v1288
    %v1290 = vmul.f32 %v1279, 1.442695
    %v1291 = vpow.pop %v1290
    %v1292 = vmul.f32 %v1280, 1.442695
    %v1293 = vpow.pop %v1292
    %v1294 = vmul.f32 %v1281, 1.442695
    %v1295 = vpow.pop %v1294
    %v1296 = vadd.f32 %v1283, 1.0
    %v1297 = vadd.f32 %v1285, 1.0
    %v1298 = vadd.f32 %v1287, 1.0
    %v1299 = vadd.f32 %v1289, 1.0
    %v1300 = vadd.f32 %v1291, 1.0
    %v1301 = vadd.f32 %v1293, 1.0
    %v1302 = vadd.f32 %v1295, 1.0
    %v1303 = vrcp.pop %v1296
    %v1304 = vmul.f32 1.0, %v1303
    %v1305 = vrcp.pop %v1297
    %v1306 = vmul.f32 1.0, %v1305
    %v1307 = vrcp.pop %v1298
    %v1308 = vmul.f32 1.0, %v1307
    %v1309 = vrcp.pop %v1299
    %v1310 = vmul.f32 1.0, %v1309
    %v1311 = vrcp.pop %v1300
    %v1312 = vmul.f32 1.0, %v1311
    %v1313 = vrcp.pop %v1301
    %v1314 = vmul.f32 1.0, %v1313
    %v1315 = vrcp.pop %v1302
    %v1316 = vmul.f32 1.0, %v1315
    %1317 = vst [vmem:[#allocation8] sm:$0x7f] %v1304
    %1318 = vst [vmem:[#allocation8 + $0x8] sm:$0x7f] %v1306
    %1319 = vst [vmem:[#allocation8 + $0x10] sm:$0x7f] %v1308
    %1320 = vst [vmem:[#allocation8 + $0x18] sm:$0x7f] %v1310
    %1321 = vst [vmem:[#allocation8 + $0x20] sm:$0x7f] %v1312
    %1322 = vst [vmem:[#allocation8 + $0x28] sm:$0x7f] %v1314
    %1323 = vst [vmem:[#allocation8 + $0x30] sm:$0x7f] %v1316
    // Predicated region
    $region22: #{tpu_custom_call.1} parent=1 // pred_check
      _
    $region23: #{tpu_custom_call.1} parent=1 // pred_check_branch
      %1325 = sbr.rel (0) target = $region25
    $region24: #{tpu_custom_call.1} parent=1 // pred_region
      %s1327 = ssub.s32 896, 896
      %1328 = vsyncadd [#allocation5], %s1327
      %s1329 = sshll.u32 [#allocation8], 4
      %s1330 = int_to_ptr.vmem [resolvable:$true] %s1329
      %1335 = dma.vmem_to_hbm [thread:$0]  %s1330, 896, %s3, [#allocation5], 128, 128, 8
    $region25: #{tpu_custom_call.1} parent=1 // pred_fallthru
      _
    // Predicated region
    $region26: #{tpu_custom_call.1} parent=1 // pred_check
      _
    $region27: #{tpu_custom_call.1} parent=1 // pred_check_branch
      %1337 = sbr.rel (0) target = $region29
    $region28: #{tpu_custom_call.1} parent=1 // pred_region
      %1338 = dma.done [#allocation5], 896
    $region29: #{tpu_custom_call.1} parent=1 // pred_fallthru
      _
    %1339 = vsyncpa [#allocation4], 1
    %1340 = vsyncpa [#allocation5], 1
    %1341 = vsyncpa [#allocation6], 1

</llo_original>
